<compile_context>
chip_gen: v6e
topology: v6e:2x2x1
jax: 0.10.0
libtpu: 0.0.40
codegen_flags: <defaults>
</compile_context>

<pallas_src>
import functools
import math

import jax
import jax.numpy as jnp
from jax.experimental import pallas as pl
from jax.experimental.pallas import tpu as pltpu

_LANE = 128


def _round_up(x, m):
    return ((x + m - 1) // m) * m


def _softplus(x):
    # matches torch.nn.functional.softplus (beta=1); stable log(1 + exp(x)).
    return jnp.logaddexp(x, 0.0)


# ----------------------------------------------------------------------------
# Single fused kernel: 4 GCN matmul stages (mean/logstd share one stage),
# reparameterization, and decoder A_pred = sigmoid(Z Z^T).
# All operands live fully in VMEM (small N / feature dims), single invocation.
# ----------------------------------------------------------------------------
def _fused_infvae_kernel(adj_ref, feat_ref, noise_ref,
                         w1_ref, w2_ref, w3_ref, wms_ref,
                         apred_ref, z_ref, *, latent_pad):
    adj = adj_ref[...]

    def gcn_linear(x, w):
        xw = jnp.dot(x, w, preferred_element_type=jnp.float32)
        return jnp.dot(adj, xw, preferred_element_type=jnp.float32)

    h = jnp.maximum(gcn_linear(feat_ref[...], w1_ref[...]), 0.0)   # gcn1
    h = jnp.maximum(gcn_linear(h, w2_ref[...]), 0.0)               # gcn2
    h = jnp.maximum(gcn_linear(h, w3_ref[...]), 0.0)               # gcn3

    # gcn_mean and gcn_logstd fused into one matmul chain: wms = [Wm | Ws].
    # latent_pad is a multiple of 128, so both slices are lane-tile aligned.
    y = gcn_linear(h, wms_ref[...])                # (N_pad, 2 * latent_pad)
    mean = jnp.maximum(y[:, :latent_pad], 0.0)     # relu (gcn_mean default act)
    # exp(softplus(x)) == 1 + exp(x): logstd itself is never an output, only
    # exp(logstd) is consumed, so skip the softplus->exp chain entirely.
    std = 1.0 + jnp.exp(y[:, latent_pad:])

    # Reparameterization. CORRECTNESS INVARIANT: padded noise columns/rows are
    # exactly 0 in the wrapper (jnp.pad zero-fill). Padded mean entries are
    # relu(0) = 0 and padded std entries are 1 + exp(0) = 2, so padded z
    # entries are 0 * 2 + 0 = 0 — the decoder Z Z^T over the padded contraction
    # dim is therefore exact. Do NOT change the noise padding to non-zero.
    z = noise_ref[...] * std + mean                # (N_pad, latent_pad)
    z_ref[...] = z                                 # lane-dense, unmasked store

    # Decoder: sigmoid(Z Z^T) with a (1,1)-contracting dot_general — no
    # in-kernel transpose, MXU fed directly.
    logits = jax.lax.dot_general(
        z, z,
        dimension_numbers=(((1,), (1,)), ((), ())),
        preferred_element_type=jnp.float32)
    apred_ref[...] = jax.nn.sigmoid(logits)


def infvae_social_forward(adj, features, noise, weights):
    """Runs the InfVAESocial forward pass. Returns (A_pred, Z)."""
    N = adj.shape[0]
    w1, w2, w3, wm, ws = weights
    input_dim = w1.shape[0]
    latent = wm.shape[1]

    # Pad every dimension (rows N, feature/hidden/latent widths) to lane
    # multiples so all matmuls, loads and stores are lane-dense. Zero padding
    # is numerically exact in f32 (see invariant comment in the kernel).
    n_pad = _round_up(N, _LANE)
    din_pad = _round_up(input_dim, _LANE)
    h1p = _round_up(w1.shape[1], _LANE)
    h2p = _round_up(w2.shape[1], _LANE)
    h3p = _round_up(w3.shape[1], _LANE)
    latent_pad = _round_up(latent, _LANE)

    def pad2(x, rows, cols):
        return jnp.pad(x, ((0, rows - x.shape[0]), (0, cols - x.shape[1])))

    adj_p = pad2(adj, n_pad, n_pad)
    feat_p = pad2(features, n_pad, din_pad)
    noise_p = pad2(noise, n_pad, latent_pad)       # zero-padded (required)
    w1_p = pad2(w1, din_pad, h1p)
    w2_p = pad2(w2, h1p, h2p)
    w3_p = pad2(w3, h2p, h3p)
    wm_p = pad2(wm, h3p, latent_pad)
    ws_p = pad2(ws, h3p, latent_pad)
    wms = jnp.concatenate([wm_p, ws_p], axis=1)    # (h3p, 2*latent_pad)

    # Advisory cost estimate for XLA scheduling around the custom call.
    flops = 0
    for din, dout in ((din_pad, h1p), (h1p, h2p), (h2p, h3p),
                      (h3p, 2 * latent_pad)):
        flops += 2 * n_pad * din * dout            # x @ W
        flops += 2 * n_pad * n_pad * dout          # adj @ (x @ W)
    flops += 2 * n_pad * n_pad * latent_pad        # Z @ Z^T
    transcendentals = n_pad * latent_pad + n_pad * n_pad   # exp, sigmoid

    io_bytes = 4 * (adj_p.size + feat_p.size + noise_p.size
                    + w1_p.size + w2_p.size + w3_p.size + wms.size
                    + n_pad * n_pad + n_pad * latent_pad)   # + both outputs
    # Intermediates (activations h1..h3, y, z) held in VMEM by the compiler.
    interm_bytes = 4 * n_pad * (h1p + h2p + h3p + 2 * latent_pad + latent_pad)
    # Right-size the VMEM request: real footprint + 2x slack for compiler
    # scratch / buffering, floor 4 MiB, capped at 48 MiB so we never
    # over-commit v7x's 64 MiB physical per-TC VMEM.
    vmem_bytes = min(max(2 * (io_bytes + interm_bytes), 4 << 20), 48 << 20)

    kernel = functools.partial(_fused_infvae_kernel, latent_pad=latent_pad)

    a_pred_p, z_p = pl.pallas_call(
        kernel,
        out_shape=(jax.ShapeDtypeStruct((n_pad, n_pad), jnp.float32),
                   jax.ShapeDtypeStruct((n_pad, latent_pad), jnp.float32)),
        compiler_params=pltpu.CompilerParams(vmem_limit_bytes=vmem_bytes),
        cost_estimate=pl.CostEstimate(flops=flops,
                                      transcendentals=transcendentals,
                                      bytes_accessed=io_bytes),
    )(adj_p, feat_p, noise_p, w1_p, w2_p, w3_p, wms)

    # Plain XLA slices back to the logical shapes.
    return a_pred_p[:N, :N], z_p[:N, :latent]


# ----------------------------------------------------------------------------
# Pure-JAX reference for verification.
# ----------------------------------------------------------------------------
def infvae_social_reference(adj, features, noise, weights):
    w1, w2, w3, wm, ws = weights
    gcn = lambda x, w, act: act(adj @ (x @ w))
    relu = lambda x: jnp.maximum(x, 0.0)
    h = gcn(features, w1, relu)
    h = gcn(h, w2, relu)
    h = gcn(h, w3, relu)
    mean = gcn(h, wm, relu)
    logstd = gcn(h, ws, _softplus)
    z = noise * jnp.exp(logstd) + mean
    return jax.nn.sigmoid(z @ z.T), z


def glorot(key, d_in, d_out):
    limit = math.sqrt(6.0 / (d_in + d_out))
    return jax.random.uniform(key, (d_in, d_out), jnp.float32, -limit, limit)


if __name__ == "__main__":
    # Small shapes consistent with the module: N nodes, feature/hidden dims.
    N = 64
    input_dim, hidden1, hidden2, hidden3, latent = 32, 32, 32, 16, 16

    key = jax.random.PRNGKey(0)
    k_adj, k_feat, k_noise, k1, k2, k3, km, ks = jax.random.split(key, 8)

    # Symmetric, row-normalized non-negative adjacency (typical GCN input).
    raw = jax.random.uniform(k_adj, (N, N), jnp.float32)
    raw = (raw + raw.T) * 0.5 + jnp.eye(N, dtype=jnp.float32)
    adj = raw / jnp.sum(raw, axis=1, keepdims=True)

    features = jax.random.normal(k_feat, (N, input_dim), jnp.float32)
    # torch.randn gaussian noise from encode(); made explicit & deterministic.
    noise = jax.random.normal(k_noise, (N, latent), jnp.float32)

    weights = (
        glorot(k1, input_dim, hidden1),
        glorot(k2, hidden1, hidden2),
        glorot(k3, hidden2, hidden3),
        glorot(km, hidden3, latent),
        glorot(ks, hidden3, latent),
    )

    a_pred, z = infvae_social_forward(adj, features, noise, weights)
    a_pred = jax.block_until_ready(a_pred)

    a_ref, z_ref = infvae_social_reference(adj, features, noise, weights)
    assert jnp.allclose(a_pred, a_ref, atol=1e-5, rtol=1e-5), "A_pred mismatch"
    assert jnp.allclose(z, z_ref, atol=1e-5, rtol=1e-5), "Z mismatch"

    print("KERNEL_OK")
</pallas_src>

<mosaic_0001>
module attributes {stable_mosaic.version = 11 : i64} {
  func.func @_fused_infvae_kernel(%arg0: memref<128x128xf32, #tpu.memory_space<vmem>>, %arg1: memref<128x128xf32, #tpu.memory_space<vmem>>, %arg2: memref<128x128xf32, #tpu.memory_space<vmem>>, %arg3: memref<128x128xf32, #tpu.memory_space<vmem>>, %arg4: memref<128x128xf32, #tpu.memory_space<vmem>>, %arg5: memref<128x128xf32, #tpu.memory_space<vmem>>, %arg6: memref<128x256xf32, #tpu.memory_space<vmem>>, %arg7: memref<128x128xf32, #tpu.memory_space<vmem>>, %arg8: memref<128x128xf32, #tpu.memory_space<vmem>>) attributes {dimension_semantics = [], scalar_prefetch = 0 : i64, scratch_operands = 0 : i64, tpu.core_type = #tpu.core_type<tc>} {
    %c0 = arith.constant 0 : index
    %c0_0 = arith.constant 0 : index
    %0 = vector.load %arg0[%c0, %c0_0] : memref<128x128xf32, #tpu.memory_space<vmem>>, vector<128x128xf32>
    %c0_1 = arith.constant 0 : index
    %c0_2 = arith.constant 0 : index
    %1 = vector.load %arg1[%c0_1, %c0_2] : memref<128x128xf32, #tpu.memory_space<vmem>>, vector<128x128xf32>
    %c0_3 = arith.constant 0 : index
    %c0_4 = arith.constant 0 : index
    %2 = vector.load %arg3[%c0_3, %c0_4] : memref<128x128xf32, #tpu.memory_space<vmem>>, vector<128x128xf32>
    %cst = arith.constant dense<0.000000e+00> : vector<128x128xf32>
    %3 = tpu.matmul %1, %2, %cst {dimension_numbers = #tpu.dot_dimension_numbers<[1], [0], [0], [1], [0, 0, 1, 1], [], []>} : vector<128x128xf32>, vector<128x128xf32>, vector<128x128xf32> -> vector<128x128xf32>
    %cst_5 = arith.constant dense<0.000000e+00> : vector<128x128xf32>
    %4 = tpu.matmul %0, %3, %cst_5 {dimension_numbers = #tpu.dot_dimension_numbers<[1], [0], [0], [1], [0, 0, 1, 1], [], []>} : vector<128x128xf32>, vector<128x128xf32>, vector<128x128xf32> -> vector<128x128xf32>
    %cst_6 = arith.constant 0.000000e+00 : f32
    %5 = vector.broadcast %cst_6 : f32 to vector<128x128xf32>
    %6 = arith.maximumf %4, %5 : vector<128x128xf32>
    %c0_7 = arith.constant 0 : index
    %c0_8 = arith.constant 0 : index
    %7 = vector.load %arg4[%c0_7, %c0_8] : memref<128x128xf32, #tpu.memory_space<vmem>>, vector<128x128xf32>
    %cst_9 = arith.constant dense<0.000000e+00> : vector<128x128xf32>
    %8 = tpu.matmul %6, %7, %cst_9 {dimension_numbers = #tpu.dot_dimension_numbers<[1], [0], [0], [1], [0, 0, 1, 1], [], []>} : vector<128x128xf32>, vector<128x128xf32>, vector<128x128xf32> -> vector<128x128xf32>
    %cst_10 = arith.constant dense<0.000000e+00> : vector<128x128xf32>
    %9 = tpu.matmul %0, %8, %cst_10 {dimension_numbers = #tpu.dot_dimension_numbers<[1], [0], [0], [1], [0, 0, 1, 1], [], []>} : vector<128x128xf32>, vector<128x128xf32>, vector<128x128xf32> -> vector<128x128xf32>
    %cst_11 = arith.constant 0.000000e+00 : f32
    %10 = vector.broadcast %cst_11 : f32 to vector<128x128xf32>
    %11 = arith.maximumf %9, %10 : vector<128x128xf32>
    %c0_12 = arith.constant 0 : index
    %c0_13 = arith.constant 0 : index
    %12 = vector.load %arg5[%c0_12, %c0_13] : memref<128x128xf32, #tpu.memory_space<vmem>>, vector<128x128xf32>
    %cst_14 = arith.constant dense<0.000000e+00> : vector<128x128xf32>
    %13 = tpu.matmul %11, %12, %cst_14 {dimension_numbers = #tpu.dot_dimension_numbers<[1], [0], [0], [1], [0, 0, 1, 1], [], []>} : vector<128x128xf32>, vector<128x128xf32>, vector<128x128xf32> -> vector<128x128xf32>
    %cst_15 = arith.constant dense<0.000000e+00> : vector<128x128xf32>
    %14 = tpu.matmul %0, %13, %cst_15 {dimension_numbers = #tpu.dot_dimension_numbers<[1], [0], [0], [1], [0, 0, 1, 1], [], []>} : vector<128x128xf32>, vector<128x128xf32>, vector<128x128xf32> -> vector<128x128xf32>
    %cst_16 = arith.constant 0.000000e+00 : f32
    %15 = vector.broadcast %cst_16 : f32 to vector<128x128xf32>
    %16 = arith.maximumf %14, %15 : vector<128x128xf32>
    %c0_17 = arith.constant 0 : index
    %c0_18 = arith.constant 0 : index
    %17 = vector.load %arg6[%c0_17, %c0_18] : memref<128x256xf32, #tpu.memory_space<vmem>>, vector<128x256xf32>
    %cst_19 = arith.constant dense<0.000000e+00> : vector<128x256xf32>
    %18 = tpu.matmul %16, %17, %cst_19 {dimension_numbers = #tpu.dot_dimension_numbers<[1], [0], [0], [1], [0, 0, 1, 1], [], []>} : vector<128x128xf32>, vector<128x256xf32>, vector<128x256xf32> -> vector<128x256xf32>
    %cst_20 = arith.constant dense<0.000000e+00> : vector<128x256xf32>
    %19 = tpu.matmul %0, %18, %cst_20 {dimension_numbers = #tpu.dot_dimension_numbers<[1], [0], [0], [1], [0, 0, 1, 1], [], []>} : vector<128x128xf32>, vector<128x256xf32>, vector<128x256xf32> -> vector<128x256xf32>
    %20 = vector.extract_strided_slice %19 {offsets = [0, 0], sizes = [128, 128], strides = [1, 1]} : vector<128x256xf32> to vector<128x128xf32>
    %cst_21 = arith.constant 0.000000e+00 : f32
    %21 = vector.broadcast %cst_21 : f32 to vector<128x128xf32>
    %22 = arith.maximumf %20, %21 : vector<128x128xf32>
    %23 = vector.extract_strided_slice %19 {offsets = [0, 128], sizes = [128, 128], strides = [1, 1]} : vector<128x256xf32> to vector<128x128xf32>
    %24 = math.exp %23 : vector<128x128xf32>
    %cst_22 = arith.constant 1.000000e+00 : f32
    %25 = vector.broadcast %cst_22 : f32 to vector<128x128xf32>
    %26 = arith.addf %25, %24 : vector<128x128xf32>
    %c0_23 = arith.constant 0 : index
    %c0_24 = arith.constant 0 : index
    %27 = vector.load %arg2[%c0_23, %c0_24] : memref<128x128xf32, #tpu.memory_space<vmem>>, vector<128x128xf32>
    %28 = arith.mulf %27, %26 : vector<128x128xf32>
    %29 = arith.addf %28, %22 : vector<128x128xf32>
    %c0_25 = arith.constant 0 : index
    %c0_26 = arith.constant 0 : index
    %30 = vector.load %arg8[%c0_25, %c0_26] : memref<128x128xf32, #tpu.memory_space<vmem>>, vector<128x128xf32>
    tpu.vector_store %arg8[%c0_25, %c0_26], %29 {strides = array<i32>} : memref<128x128xf32, #tpu.memory_space<vmem>>, vector<128x128xf32>,
    %cst_27 = arith.constant dense<0.000000e+00> : vector<128x128xf32>
    %31 = tpu.matmul %29, %29, %cst_27 {dimension_numbers = #tpu.dot_dimension_numbers<[1], [1], [0], [0], [0, 0, 1, 0], [], []>} : vector<128x128xf32>, vector<128x128xf32>, vector<128x128xf32> -> vector<128x128xf32>
    %32 = arith.negf %31 : vector<128x128xf32>
    %33 = math.exp %32 : vector<128x128xf32>
    %cst_28 = arith.constant 1.000000e+00 : f32
    %34 = vector.broadcast %cst_28 : f32 to vector<128x128xf32>
    %35 = arith.addf %34, %33 : vector<128x128xf32>
    %36 = arith.divf %34, %35 : vector<128x128xf32>
    %c0_29 = arith.constant 0 : index
    %c0_30 = arith.constant 0 : index
    %37 = vector.load %arg7[%c0_29, %c0_30] : memref<128x128xf32, #tpu.memory_space<vmem>>, vector<128x128xf32>
    tpu.vector_store %arg7[%c0_29, %c0_30], %36 {strides = array<i32>} : memref<128x128xf32, #tpu.memory_space<vmem>>, vector<128x128xf32>,
    return
  }
}

</mosaic_0001>

<llo_original>
// kernel: tpu_custom_call.1
$region0: #{tpu_custom_call.1}
  #allocation0 [shape = 'u32[]', space=smem, size = 0x4, offset = 0x4, fixed_abs, tag = 'smem constant byte address 0x4 - core index']
  #allocation1 [shape = 'u32[144,128]{1,0:T(1,128)}', space=vmem, size = 0x12000, scoped, tag = 'internal scratch']
  %s0 = inlined_call_operand.hbm [shape: f32[128,128], index: 0, kind: input, shape index: {}]
  %s1 = inlined_call_operand.hbm [shape: f32[128,128], index: 1, kind: input, shape index: {}]
  %s2 = inlined_call_operand.hbm [shape: f32[128,128], index: 2, kind: input, shape index: {}]
  %s3 = inlined_call_operand.hbm [shape: f32[128,128], index: 3, kind: input, shape index: {}]
  %s4 = inlined_call_operand.hbm [shape: f32[128,128], index: 4, kind: input, shape index: {}]
  %s5 = inlined_call_operand.hbm [shape: f32[128,128], index: 5, kind: input, shape index: {}]
  %s6 = inlined_call_operand.hbm [shape: f32[128,256], index: 6, kind: input, shape index: {}]
  %s7 = inlined_call_operand.hbm [shape: f32[128,128], index: 7, kind: output, shape index: {0}]
  %s8 = inlined_call_operand.hbm [shape: f32[128,128], index: 8, kind: output, shape index: {1}]
  %9 = xla_tuple %s7, %s8
  %s10 = sld [smem:[#allocation0]]
  $region74: #{tpu_custom_call.1} parent=0
    _
  %s12 = ssub.s32 1, %s10
  %s13 = scalar_select 0, %s12, %s10
  $region1: #{tpu_custom_call.1} parent=0
    #allocation2 [shape = 'u8[65536]{0}', space=vmem, size = 0x10000, scoped, tag = 'input window, operand 0, single buffered']
    #allocation3 [shape = 's32[1]{0}', space=sflag, size = 0x4, scoped, tag = 'scoped memory for tpu_custom_call.1']
    #allocation4 [shape = 's32[1]{0}', space=sflag, size = 0x4, scoped, tag = 'scoped memory for tpu_custom_call.1']
    #allocation5 [shape = 'u8[65536]{0}', space=vmem, size = 0x10000, scoped, tag = 'input window, operand 1, single buffered']
    #allocation6 [shape = 's32[1]{0}', space=sflag, size = 0x4, scoped, tag = 'scoped memory for tpu_custom_call.1']
    #allocation7 [shape = 'u8[65536]{0}', space=vmem, size = 0x10000, scoped, tag = 'input window, operand 2, single buffered']
    #allocation8 [shape = 'u8[65536]{0}', space=vmem, size = 0x10000, scoped, tag = 'input window, operand 3, single buffered']
    #allocation9 [shape = 's32[1]{0}', space=sflag, size = 0x4, scoped, tag = 'scoped memory for tpu_custom_call.1']
    #allocation10 [shape = 'u8[65536]{0}', space=vmem, size = 0x10000, scoped, tag = 'input window, operand 4, single buffered']
    #allocation11 [shape = 'u8[65536]{0}', space=vmem, size = 0x10000, scoped, tag = 'input window, operand 5, single buffered']
    #allocation12 [shape = 's32[1]{0}', space=sflag, size = 0x4, scoped, tag = 'scoped memory for tpu_custom_call.1']
    #allocation13 [shape = 'u8[131072]{0}', space=vmem, size = 0x20000, scoped, tag = 'input window, operand 6, single buffered']
    #allocation14 [shape = 'u8[65536]{0}', space=vmem, size = 0x10000, scoped, tag = 'output window, operand 0, single buffered']
    #allocation15 [shape = 'u8[65536]{0}', space=vmem, size = 0x10000, scoped, tag = 'output window, operand 1, single buffered']
    #allocation16 [shape = 's32[1]{0}', space=sflag, size = 0x4, scoped, tag = 'scoped memory for tpu_custom_call.1']
    %14 = vsyncpa [#allocation3], 0
    %15 = vsyncpa [#allocation6], 0
    %16 = vsyncpa [#allocation9], 0
    %17 = vsyncpa [#allocation12], 0
    %18 = vsyncpa [#allocation4], 0
    %19 = vsyncpa [#allocation16], 0
    // Predicated region
    $region2: #{tpu_custom_call.1} parent=1 // pred_check
      _
    $region3: #{tpu_custom_call.1} parent=1 // pred_check_branch
      %21 = sbr.rel (0) target = $region5
    $region4: #{tpu_custom_call.1} parent=1 // pred_region
      %s23 = ssub.s32 2048, 2048
      %24 = vsyncadd [#allocation3], %s23
      %s25 = sshll.u32 [#allocation2], 4
      %s26 = int_to_ptr.vmem [resolvable:$true] %s25
      %31 = dma.hbm_to_vmem [thread:$0]  %s0, 2048, %s26, [#allocation3], 128, 128, 8
    $region5: #{tpu_custom_call.1} parent=1 // pred_fallthru
      _
    // Predicated region
    $region6: #{tpu_custom_call.1} parent=1 // pred_check
      _
    $region7: #{tpu_custom_call.1} parent=1 // pred_check_branch
      %33 = sbr.rel (0) target = $region9
    $region8: #{tpu_custom_call.1} parent=1 // pred_region
      %s35 = ssub.s32 2048, 2048
      %36 = vsyncadd [#allocation6], %s35
      %s37 = sshll.u32 [#allocation5], 4
      %s38 = int_to_ptr.vmem [resolvable:$true] %s37
      %43 = dma.hbm_to_vmem [thread:$0]  %s1, 2048, %s38, [#allocation6], 128, 128, 8
    $region9: #{tpu_custom_call.1} parent=1 // pred_fallthru
      _
    // Predicated region
    $region10: #{tpu_custom_call.1} parent=1 // pred_check
      _
    $region11: #{tpu_custom_call.1} parent=1 // pred_check_branch
      %45 = sbr.rel (0) target = $region13
    $region12: #{tpu_custom_call.1} parent=1 // pred_region
      %s47 = ssub.s32 2048, 2048
      %48 = vsyncadd [#allocation6], %s47
      %s49 = sshll.u32 [#allocation7], 4
      %s50 = int_to_ptr.vmem [resolvable:$true] %s49
      %55 = dma.hbm_to_vmem [thread:$0]  %s2, 2048, %s50, [#allocation6], 128, 128, 8
    $region13: #{tpu_custom_call.1} parent=1 // pred_fallthru
      _
    // Predicated region
    $region14: #{tpu_custom_call.1} parent=1 // pred_check
      _
    $region15: #{tpu_custom_call.1} parent=1 // pred_check_branch
      %57 = sbr.rel (0) target = $region17
    $region16: #{tpu_custom_call.1} parent=1 // pred_region
      %s59 = ssub.s32 2048, 2048
      %60 = vsyncadd [#allocation9], %s59
      %s61 = sshll.u32 [#allocation8], 4
      %s62 = int_to_ptr.vmem [resolvable:$true] %s61
      %67 = dma.hbm_to_vmem [thread:$0]  %s3, 2048, %s62, [#allocation9], 128, 128, 8
    $region17: #{tpu_custom_call.1} parent=1 // pred_fallthru
      _
    // Predicated region
    $region18: #{tpu_custom_call.1} parent=1 // pred_check
      _
    $region19: #{tpu_custom_call.1} parent=1 // pred_check_branch
      %69 = sbr.rel (0) target = $region21
    $region20: #{tpu_custom_call.1} parent=1 // pred_region
      %s71 = ssub.s32 2048, 2048
      %72 = vsyncadd [#allocation9], %s71
      %s73 = sshll.u32 [#allocation10], 4
      %s74 = int_to_ptr.vmem [resolvable:$true] %s73
      %79 = dma.hbm_to_vmem [thread:$0]  %s4, 2048, %s74, [#allocation9], 128, 128, 8
    $region21: #{tpu_custom_call.1} parent=1 // pred_fallthru
      _
    // Predicated region
    $region22: #{tpu_custom_call.1} parent=1 // pred_check
      _
    $region23: #{tpu_custom_call.1} parent=1 // pred_check_branch
      %81 = sbr.rel (0) target = $region25
    $region24: #{tpu_custom_call.1} parent=1 // pred_region
      %s83 = ssub.s32 2048, 2048
      %84 = vsyncadd [#allocation12], %s83
      %s85 = sshll.u32 [#allocation11], 4
      %s86 = int_to_ptr.vmem [resolvable:$true] %s85
      %91 = dma.hbm_to_vmem [thread:$0]  %s5, 2048, %s86, [#allocation12], 128, 128, 8
    $region25: #{tpu_custom_call.1} parent=1 // pred_fallthru
      _
    // Predicated region
    $region26: #{tpu_custom_call.1} parent=1 // pred_check
      _
    $region27: #{tpu_custom_call.1} parent=1 // pred_check_branch
      %93 = sbr.rel (0) target = $region29
    $region28: #{tpu_custom_call.1} parent=1 // pred_region
      %s95 = ssub.s32 4096, 4096
      %96 = vsyncadd [#allocation12], %s95
      %s97 = sshll.u32 [#allocation13], 4
      %s98 = int_to_ptr.vmem [resolvable:$true] %s97
      %103 = dma.hbm_to_vmem [thread:$0]  %s6, 4096, %s98, [#allocation12], 256, 256, 16
    $region29: #{tpu_custom_call.1} parent=1 // pred_fallthru
      _
    // Predicated region
    $region30: #{tpu_custom_call.1} parent=1 // pred_check
      _
    $region31: #{tpu_custom_call.1} parent=1 // pred_check_branch
      %105 = sbr.rel (0) target = $region33
    $region32: #{tpu_custom_call.1} parent=1 // pred_region
      %106 = dma.done [#allocation3], 2048
    $region33: #{tpu_custom_call.1} parent=1 // pred_fallthru
      _
    // Predicated region
    $region34: #{tpu_custom_call.1} parent=1 // pred_check
      _
    $region35: #{tpu_custom_call.1} parent=1 // pred_check_branch
      %108 = sbr.rel (0) target = $region37
    $region36: #{tpu_custom_call.1} parent=1 // pred_region
      %109 = dma.done [#allocation6], 2048
    $region37: #{tpu_custom_call.1} parent=1 // pred_fallthru
      _
    // Predicated region
    $region38: #{tpu_custom_call.1} parent=1 // pred_check
      _
    $region39: #{tpu_custom_call.1} parent=1 // pred_check_branch
      %111 = sbr.rel (0) target = $region41
    $region40: #{tpu_custom_call.1} parent=1 // pred_region
      %112 = dma.done [#allocation6], 2048
    $region41: #{tpu_custom_call.1} parent=1 // pred_fallthru
      _
    // Predicated region
    $region42: #{tpu_custom_call.1} parent=1 // pred_check
      _
    $region43: #{tpu_custom_call.1} parent=1 // pred_check_branch
      %114 = sbr.rel (0) target = $region45
    $region44: #{tpu_custom_call.1} parent=1 // pred_region
      %115 = dma.done [#allocation9], 2048
    $region45: #{tpu_custom_call.1} parent=1 // pred_fallthru
      _
    // Predicated region
    $region46: #{tpu_custom_call.1} parent=1 // pred_check
      _
    $region47: #{tpu_custom_call.1} parent=1 // pred_check_branch
      %117 = sbr.rel (0) target = $region49
    $region48: #{tpu_custom_call.1} parent=1 // pred_region
      %118 = dma.done [#allocation9], 2048
    $region49: #{tpu_custom_call.1} parent=1 // pred_fallthru
      _
    // Predicated region
    $region50: #{tpu_custom_call.1} parent=1 // pred_check
      _
    $region51: #{tpu_custom_call.1} parent=1 // pred_check_branch
      %120 = sbr.rel (0) target = $region53
    $region52: #{tpu_custom_call.1} parent=1 // pred_region
      %121 = dma.done [#allocation12], 2048
    $region53: #{tpu_custom_call.1} parent=1 // pred_fallthru
      _
    // Predicated region
    $region54: #{tpu_custom_call.1} parent=1 // pred_check
      _
    $region55: #{tpu_custom_call.1} parent=1 // pred_check_branch
      %123 = sbr.rel (0) target = $region57
    $region56: #{tpu_custom_call.1} parent=1 // pred_region
      %124 = dma.done [#allocation12], 4096
    $region57: #{tpu_custom_call.1} parent=1 // pred_fallthru
      _
    %v125 = vld [vmem:[#allocation2] sm:$0xff]
    %v126 = vld [vmem:[#allocation2 + $0x8] sm:$0xff]
    %v127 = vld [vmem:[#allocation2 + $0x10] sm:$0xff]
    %v128 = vld [vmem:[#allocation2 + $0x18] sm:$0xff]
    %v129 = vld [vmem:[#allocation2 + $0x20] sm:$0xff]
    %v130 = vld [vmem:[#allocation2 + $0x28] sm:$0xff]
    %v131 = vld [vmem:[#allocation2 + $0x30] sm:$0xff]
    %v132 = vld [vmem:[#allocation2 + $0x38] sm:$0xff]
    %v133 = vld [vmem:[#allocation2 + $0x40] sm:$0xff]
    %v134 = vld [vmem:[#allocation2 + $0x48] sm:$0xff]
    %v135 = vld [vmem:[#allocation2 + $0x50] sm:$0xff]
    %v136 = vld [vmem:[#allocation2 + $0x58] sm:$0xff]
    %v137 = vld [vmem:[#allocation2 + $0x60] sm:$0xff]
    %v138 = vld [vmem:[#allocation2 + $0x68] sm:$0xff]
    %v139 = vld [vmem:[#allocation2 + $0x70] sm:$0xff]
    %v140 = vld [vmem:[#allocation2 + $0x78] sm:$0xff]
    %v141 = vld [vmem:[#allocation5] sm:$0xff]
    %v142 = vld [vmem:[#allocation5 + $0x8] sm:$0xff]
    %v143 = vld [vmem:[#allocation5 + $0x10] sm:$0xff]
    %v144 = vld [vmem:[#allocation5 + $0x18] sm:$0xff]
    %v145 = vld [vmem:[#allocation5 + $0x20] sm:$0xff]
    %v146 = vld [vmem:[#allocation5 + $0x28] sm:$0xff]
    %v147 = vld [vmem:[#allocation5 + $0x30] sm:$0xff]
    %v148 = vld [vmem:[#allocation5 + $0x38] sm:$0xff]
    %v149 = vld [vmem:[#allocation5 + $0x40] sm:$0xff]
    %v150 = vld [vmem:[#allocation5 + $0x48] sm:$0xff]
    %v151 = vld [vmem:[#allocation5 + $0x50] sm:$0xff]
    %v152 = vld [vmem:[#allocation5 + $0x58] sm:$0xff]
    %v153 = vld [vmem:[#allocation5 + $0x60] sm:$0xff]
    %v154 = vld [vmem:[#allocation5 + $0x68] sm:$0xff]
    %v155 = vld [vmem:[#allocation5 + $0x70] sm:$0xff]
    %v156 = vld [vmem:[#allocation5 + $0x78] sm:$0xff]
    %v157 = vld [vmem:[#allocation8] sm:$0xff]
    %v158 = vld [vmem:[#allocation8 + $0x8] sm:$0xff]
    %v159 = vld [vmem:[#allocation8 + $0x10] sm:$0xff]
    %v160 = vld [vmem:[#allocation8 + $0x18] sm:$0xff]
    %v161 = vld [vmem:[#allocation8 + $0x20] sm:$0xff]
    %v162 = vld [vmem:[#allocation8 + $0x28] sm:$0xff]
    %v163 = vld [vmem:[#allocation8 + $0x30] sm:$0xff]
    %v164 = vld [vmem:[#allocation8 + $0x38] sm:$0xff]
    %v165 = vld [vmem:[#allocation8 + $0x40] sm:$0xff]
    %v166 = vld [vmem:[#allocation8 + $0x48] sm:$0xff]
    %v167 = vld [vmem:[#allocation8 + $0x50] sm:$0xff]
    %v168 = vld [vmem:[#allocation8 + $0x58] sm:$0xff]
    %v169 = vld [vmem:[#allocation8 + $0x60] sm:$0xff]
    %v170 = vld [vmem:[#allocation8 + $0x68] sm:$0xff]
    %v171 = vld [vmem:[#allocation8 + $0x70] sm:$0xff]
    %v172 = vld [vmem:[#allocation8 + $0x78] sm:$0xff]
    %173 = vmatprep.subr.mxu0 0.0
    %174 = vmatpush1.msra.mxu0 %v172
    %175 = vmatprep.subr.mxu0 0.0
    %176 = vmatpush1.msra.mxu0 %v171
    %177 = vmatprep.subr.mxu0 0.0
    %178 = vmatpush1.msra.mxu0 %v170
    %179 = vmatprep.subr.mxu0 0.0
    %180 = vmatpush1.msra.mxu0 %v169
    %181 = vmatprep.subr.mxu0 0.0
    %182 = vmatpush1.msra.mxu0 %v168
    %183 = vmatprep.subr.mxu0 0.0
    %184 = vmatpush1.msra.mxu0 %v167
    %185 = vmatprep.subr.mxu0 0.0
    %186 = vmatpush1.msra.mxu0 %v166
    %187 = vmatprep.subr.mxu0 0.0
    %188 = vmatpush1.msra.mxu0 %v165
    %189 = vmatprep.subr.mxu0 0.0
    %190 = vmatpush1.msra.mxu0 %v164
    %191 = vmatprep.subr.mxu0 0.0
    %192 = vmatpush1.msra.mxu0 %v163
    %193 = vmatprep.subr.mxu0 0.0
    %194 = vmatpush1.msra.mxu0 %v162
    %195 = vmatprep.subr.mxu0 0.0
    %196 = vmatpush1.msra.mxu0 %v161
    %197 = vmatprep.subr.mxu0 0.0
    %198 = vmatpush1.msra.mxu0 %v160
    %199 = vmatprep.subr.mxu0 0.0
    %200 = vmatpush1.msra.mxu0 %v159
    %201 = vmatprep.subr.mxu0 0.0
    %202 = vmatpush1.msra.mxu0 %v158
    %203 = vmatprep.subr.mxu0 0.0
    %204 = vmatpush1.msra.mxu0 %v157
    %205 = vmatprep.subr.mxu0 0.0
    %206 = vmatpush2.msra.mxu0 0.0
    %207 = vmatprep.subr.mxu0 0.0
    %208 = vmatpush2.msra.mxu0 0.0
    %209 = vmatprep.subr.mxu0 0.0
    %210 = vmatpush2.msra.mxu0 0.0
    %211 = vmatprep.subr.mxu0 0.0
    %212 = vmatpush2.msra.mxu0 0.0
    %213 = vmatprep.subr.mxu0 0.0
    %214 = vmatpush2.msra.mxu0 0.0
    %215 = vmatprep.subr.mxu0 0.0
    %216 = vmatpush2.msra.mxu0 0.0
    %217 = vmatprep.subr.mxu0 0.0
    %218 = vmatpush2.msra.mxu0 0.0
    %219 = vmatprep.subr.mxu0 0.0
    %220 = vmatpush2.msra.mxu0 0.0
    %221 = vmatprep.subr.mxu0 0.0
    %222 = vmatpush2.msra.mxu0 0.0
    %223 = vmatprep.subr.mxu0 0.0
    %224 = vmatpush2.msra.mxu0 0.0
    %225 = vmatprep.subr.mxu0 0.0
    %226 = vmatpush2.msra.mxu0 0.0
    %227 = vmatprep.subr.mxu0 0.0
    %228 = vmatpush2.msra.mxu0 0.0
    %229 = vmatprep.subr.mxu0 0.0
    %230 = vmatpush2.msra.mxu0 0.0
    %231 = vmatprep.subr.mxu0 0.0
    %232 = vmatpush2.msra.mxu0 0.0
    %233 = vmatprep.subr.mxu0 0.0
    %234 = vmatpush2.msra.mxu0 0.0
    %235 = vmatprep.subr.mxu0 0.0
    %236 = vmatpush2.msra.mxu0 0.0
    %237 = vmatprep.mubr.f32.mxu0 0.0
    %238 = vmatmul.mubr.f32.gmra.mxu0 %v141
    %v239 = vpop.f32.mrf.mxu0
    %v240 = vadd.f32 0.0, %v239
    %v241 = vpop.f32.mrf.mxu0
    %242 = vmatprep.mubr.f32.mxu0 0.0
    %243 = vmatmul.mubr.f32.gmra.mxu0 %v142
    %v244 = vpop.f32.mrf.mxu0
    %v245 = vadd.f32 0.0, %v244
    %v246 = vpop.f32.mrf.mxu0
    %247 = vmatprep.mubr.f32.mxu0 0.0
    %248 = vmatmul.mubr.f32.gmra.mxu0 %v143
    %v249 = vpop.f32.mrf.mxu0
    %v250 = vadd.f32 0.0, %v249
    %v251 = vpop.f32.mrf.mxu0
    %252 = vmatprep.mubr.f32.mxu0 0.0
    %253 = vmatmul.mubr.f32.gmra.mxu0 %v144
    %v254 = vpop.f32.mrf.mxu0
    %v255 = vadd.f32 0.0, %v254
    %v256 = vpop.f32.mrf.mxu0
    %257 = vmatprep.mubr.f32.mxu0 0.0
    %258 = vmatmul.mubr.f32.gmra.mxu0 %v145
    %v259 = vpop.f32.mrf.mxu0
    %v260 = vadd.f32 0.0, %v259
    %v261 = vpop.f32.mrf.mxu0
    %262 = vmatprep.mubr.f32.mxu0 0.0
    %263 = vmatmul.mubr.f32.gmra.mxu0 %v146
    %v264 = vpop.f32.mrf.mxu0
    %v265 = vadd.f32 0.0, %v264
    %v266 = vpop.f32.mrf.mxu0
    %267 = vmatprep.mubr.f32.mxu0 0.0
    %268 = vmatmul.mubr.f32.gmra.mxu0 %v147
    %v269 = vpop.f32.mrf.mxu0
    %v270 = vadd.f32 0.0, %v269
    %v271 = vpop.f32.mrf.mxu0
    %272 = vmatprep.mubr.f32.mxu0 0.0
    %273 = vmatmul.mubr.f32.gmra.mxu0 %v148
    %v274 = vpop.f32.mrf.mxu0
    %v275 = vadd.f32 0.0, %v274
    %v276 = vpop.f32.mrf.mxu0
    %277 = vmatprep.mubr.f32.mxu0 0.0
    %278 = vmatmul.mubr.f32.gmra.mxu0 %v149
    %v279 = vpop.f32.mrf.mxu0
    %v280 = vadd.f32 0.0, %v279
    %v281 = vpop.f32.mrf.mxu0
    %282 = vmatprep.mubr.f32.mxu0 0.0
    %283 = vmatmul.mubr.f32.gmra.mxu0 %v150
    %v284 = vpop.f32.mrf.mxu0
    %v285 = vadd.f32 0.0, %v284
    %v286 = vpop.f32.mrf.mxu0
    %287 = vmatprep.mubr.f32.mxu0 0.0
    %288 = vmatmul.mubr.f32.gmra.mxu0 %v151
    %v289 = vpop.f32.mrf.mxu0
    %v290 = vadd.f32 0.0, %v289
    %v291 = vpop.f32.mrf.mxu0
    %292 = vmatprep.mubr.f32.mxu0 0.0
    %293 = vmatmul.mubr.f32.gmra.mxu0 %v152
    %v294 = vpop.f32.mrf.mxu0
    %v295 = vadd.f32 0.0, %v294
    %v296 = vpop.f32.mrf.mxu0
    %297 = vmatprep.mubr.f32.mxu0 0.0
    %298 = vmatmul.mubr.f32.gmra.mxu0 %v153
    %v299 = vpop.f32.mrf.mxu0
    %v300 = vadd.f32 0.0, %v299
    %v301 = vpop.f32.mrf.mxu0
    %302 = vmatprep.mubr.f32.mxu0 0.0
    %303 = vmatmul.mubr.f32.gmra.mxu0 %v154
    %v304 = vpop.f32.mrf.mxu0
    %v305 = vadd.f32 0.0, %v304
    %v306 = vpop.f32.mrf.mxu0
    %307 = vmatprep.mubr.f32.mxu0 0.0
    %308 = vmatmul.mubr.f32.gmra.mxu0 %v155
    %v309 = vpop.f32.mrf.mxu0
    %v310 = vadd.f32 0.0, %v309
    %v311 = vpop.f32.mrf.mxu0
    %312 = vmatprep.mubr.f32.mxu0 0.0
    %313 = vmatmul.mubr.f32.gmra.mxu0 %v156
    %v314 = vpop.f32.mrf.mxu0
    %v315 = vadd.f32 0.0, %v314
    %v316 = vpop.f32.mrf.mxu0
    %317 = vdwg.mxu0
    %318 = vmatprep.subr.mxu0 0.0
    %319 = vmatpush1.msra.mxu0 %v315
    %320 = vmatprep.subr.mxu0 0.0
    %321 = vmatpush1.msra.mxu0 %v310
    %322 = vmatprep.subr.mxu0 0.0
    %323 = vmatpush1.msra.mxu0 %v305
    %324 = vmatprep.subr.mxu0 0.0
    %325 = vmatpush1.msra.mxu0 %v300
    %326 = vmatprep.subr.mxu0 0.0
    %327 = vmatpush1.msra.mxu0 %v295
    %328 = vmatprep.subr.mxu0 0.0
    %329 = vmatpush1.msra.mxu0 %v290
    %330 = vmatprep.subr.mxu0 0.0
    %331 = vmatpush1.msra.mxu0 %v285
    %332 = vmatprep.subr.mxu0 0.0
    %333 = vmatpush1.msra.mxu0 %v280
    %334 = vmatprep.subr.mxu0 0.0
    %335 = vmatpush1.msra.mxu0 %v275
    %336 = vmatprep.subr.mxu0 0.0
    %337 = vmatpush1.msra.mxu0 %v270
    %338 = vmatprep.subr.mxu0 0.0
    %339 = vmatpush1.msra.mxu0 %v265
    %340 = vmatprep.subr.mxu0 0.0
    %341 = vmatpush1.msra.mxu0 %v260
    %342 = vmatprep.subr.mxu0 0.0
    %343 = vmatpush1.msra.mxu0 %v255
    %344 = vmatprep.subr.mxu0 0.0
    %345 = vmatpush1.msra.mxu0 %v250
    %346 = vmatprep.subr.mxu0 0.0
    %347 = vmatpush1.msra.mxu0 %v245
    %348 = vmatprep.subr.mxu0 0.0
    %349 = vmatpush1.msra.mxu0 %v240
    %350 = vmatprep.subr.mxu0 0.0
    %351 = vmatpush2.msra.mxu0 0.0
    %352 = vmatprep.subr.mxu0 0.0
    %353 = vmatpush2.msra.mxu0 0.0
    %354 = vmatprep.subr.mxu0 0.0
    %355 = vmatpush2.msra.mxu0 0.0
    %356 = vmatprep.subr.mxu0 0.0
    %357 = vmatpush2.msra.mxu0 0.0
    %358 = vmatprep.subr.mxu0 0.0
    %359 = vmatpush2.msra.mxu0 0.0
    %360 = vmatprep.subr.mxu0 0.0
    %361 = vmatpush2.msra.mxu0 0.0
    %362 = vmatprep.subr.mxu0 0.0
    %363 = vmatpush2.msra.mxu0 0.0
    %364 = vmatprep.subr.mxu0 0.0
    %365 = vmatpush2.msra.mxu0 0.0
    %366 = vmatprep.subr.mxu0 0.0
    %367 = vmatpush2.msra.mxu0 0.0
    %368 = vmatprep.subr.mxu0 0.0
    %369 = vmatpush2.msra.mxu0 0.0
    %370 = vmatprep.subr.mxu0 0.0
    %371 = vmatpush2.msra.mxu0 0.0
    %372 = vmatprep.subr.mxu0 0.0
    %373 = vmatpush2.msra.mxu0 0.0
    %374 = vmatprep.subr.mxu0 0.0
    %375 = vmatpush2.msra.mxu0 0.0
    %376 = vmatprep.subr.mxu0 0.0
    %377 = vmatpush2.msra.mxu0 0.0
    %378 = vmatprep.subr.mxu0 0.0
    %379 = vmatpush2.msra.mxu0 0.0
    %380 = vmatprep.subr.mxu0 0.0
    %381 = vmatpush2.msra.mxu0 0.0
    %382 = vmatprep.mubr.f32.mxu0 0.0
    %383 = vmatmul.mubr.f32.gmra.mxu0 %v125
    %v384 = vpop.f32.mrf.mxu0
    %v385 = vadd.f32 0.0, %v384
    %v386 = vpop.f32.mrf.mxu0
    %387 = vmatprep.mubr.f32.mxu0 0.0
    %388 = vmatmul.mubr.f32.gmra.mxu0 %v126
    %v389 = vpop.f32.mrf.mxu0
    %v390 = vadd.f32 0.0, %v389
    %v391 = vpop.f32.mrf.mxu0
    %392 = vmatprep.mubr.f32.mxu0 0.0
    %393 = vmatmul.mubr.f32.gmra.mxu0 %v127
    %v394 = vpop.f32.mrf.mxu0
    %v395 = vadd.f32 0.0, %v394
    %v396 = vpop.f32.mrf.mxu0
    %397 = vmatprep.mubr.f32.mxu0 0.0
    %398 = vmatmul.mubr.f32.gmra.mxu0 %v128
    %v399 = vpop.f32.mrf.mxu0
    %v400 = vadd.f32 0.0, %v399
    %v401 = vpop.f32.mrf.mxu0
    %402 = vmatprep.mubr.f32.mxu0 0.0
    %403 = vmatmul.mubr.f32.gmra.mxu0 %v129
    %v404 = vpop.f32.mrf.mxu0
    %v405 = vadd.f32 0.0, %v404
    %v406 = vpop.f32.mrf.mxu0
    %407 = vmatprep.mubr.f32.mxu0 0.0
    %408 = vmatmul.mubr.f32.gmra.mxu0 %v130
    %v409 = vpop.f32.mrf.mxu0
    %v410 = vadd.f32 0.0, %v409
    %v411 = vpop.f32.mrf.mxu0
    %412 = vmatprep.mubr.f32.mxu0 0.0
    %413 = vmatmul.mubr.f32.gmra.mxu0 %v131
    %v414 = vpop.f32.mrf.mxu0
    %v415 = vadd.f32 0.0, %v414
    %v416 = vpop.f32.mrf.mxu0
    %417 = vmatprep.mubr.f32.mxu0 0.0
    %418 = vmatmul.mubr.f32.gmra.mxu0 %v132
    %v419 = vpop.f32.mrf.mxu0
    %v420 = vadd.f32 0.0, %v419
    %v421 = vpop.f32.mrf.mxu0
    %422 = vmatprep.mubr.f32.mxu0 0.0
    %423 = vmatmul.mubr.f32.gmra.mxu0 %v133
    %v424 = vpop.f32.mrf.mxu0
    %v425 = vadd.f32 0.0, %v424
    %v426 = vpop.f32.mrf.mxu0
    %427 = vmatprep.mubr.f32.mxu0 0.0
    %428 = vmatmul.mubr.f32.gmra.mxu0 %v134
    %v429 = vpop.f32.mrf.mxu0
    %v430 = vadd.f32 0.0, %v429
    %v431 = vpop.f32.mrf.mxu0
    %432 = vmatprep.mubr.f32.mxu0 0.0
    %433 = vmatmul.mubr.f32.gmra.mxu0 %v135
    %v434 = vpop.f32.mrf.mxu0
    %v435 = vadd.f32 0.0, %v434
    %v436 = vpop.f32.mrf.mxu0
    %437 = vmatprep.mubr.f32.mxu0 0.0
    %438 = vmatmul.mubr.f32.gmra.mxu0 %v136
    %v439 = vpop.f32.mrf.mxu0
    %v440 = vadd.f32 0.0, %v439
    %v441 = vpop.f32.mrf.mxu0
    %442 = vmatprep.mubr.f32.mxu0 0.0
    %443 = vmatmul.mubr.f32.gmra.mxu0 %v137
    %v444 = vpop.f32.mrf.mxu0
    %v445 = vadd.f32 0.0, %v444
    %v446 = vpop.f32.mrf.mxu0
    %447 = vmatprep.mubr.f32.mxu0 0.0
    %448 = vmatmul.mubr.f32.gmra.mxu0 %v138
    %v449 = vpop.f32.mrf.mxu0
    %v450 = vadd.f32 0.0, %v449
    %v451 = vpop.f32.mrf.mxu0
    %452 = vmatprep.mubr.f32.mxu0 0.0
    %453 = vmatmul.mubr.f32.gmra.mxu0 %v139
    %v454 = vpop.f32.mrf.mxu0
    %v455 = vadd.f32 0.0, %v454
    %v456 = vpop.f32.mrf.mxu0
    %457 = vmatprep.mubr.f32.mxu0 0.0
    %458 = vmatmul.mubr.f32.gmra.mxu0 %v140
    %v459 = vpop.f32.mrf.mxu0
    %v460 = vadd.f32 0.0, %v459
    %v461 = vpop.f32.mrf.mxu0
    %462 = vdwg.mxu0
    %v463 = vmax.f32 %v385, 0.0
    %v464 = vmax.f32 %v390, 0.0
    %v465 = vmax.f32 %v395, 0.0
    %v466 = vmax.f32 %v400, 0.0
    %v467 = vmax.f32 %v405, 0.0
    %v468 = vmax.f32 %v410, 0.0
    %v469 = vmax.f32 %v415, 0.0
    %v470 = vmax.f32 %v420, 0.0
    %v471 = vmax.f32 %v425, 0.0
    %v472 = vmax.f32 %v430, 0.0
    %v473 = vmax.f32 %v435, 0.0
    %v474 = vmax.f32 %v440, 0.0
    %v475 = vmax.f32 %v445, 0.0
    %v476 = vmax.f32 %v450, 0.0
    %v477 = vmax.f32 %v455, 0.0
    %v478 = vmax.f32 %v460, 0.0
    %v479 = vld [vmem:[#allocation10] sm:$0xff]
    %v480 = vld [vmem:[#allocation10 + $0x8] sm:$0xff]
    %v481 = vld [vmem:[#allocation10 + $0x10] sm:$0xff]
    %v482 = vld [vmem:[#allocation10 + $0x18] sm:$0xff]
    %v483 = vld [vmem:[#allocation10 + $0x20] sm:$0xff]
    %v484 = vld [vmem:[#allocation10 + $0x28] sm:$0xff]
    %v485 = vld [vmem:[#allocation10 + $0x30] sm:$0xff]
    %v486 = vld [vmem:[#allocation10 + $0x38] sm:$0xff]
    %v487 = vld [vmem:[#allocation10 + $0x40] sm:$0xff]
    %v488 = vld [vmem:[#allocation10 + $0x48] sm:$0xff]
    %v489 = vld [vmem:[#allocation10 + $0x50] sm:$0xff]
    %v490 = vld [vmem:[#allocation10 + $0x58] sm:$0xff]
    %v491 = vld [vmem:[#allocation10 + $0x60] sm:$0xff]
    %v492 = vld [vmem:[#allocation10 + $0x68] sm:$0xff]
    %v493 = vld [vmem:[#allocation10 + $0x70] sm:$0xff]
    %v494 = vld [vmem:[#allocation10 + $0x78] sm:$0xff]
    %495 = vmatprep.subr.mxu0 0.0
    %496 = vmatpush1.msra.mxu0 %v494
    %497 = vmatprep.subr.mxu0 0.0
    %498 = vmatpush1.msra.mxu0 %v493
    %499 = vmatprep.subr.mxu0 0.0
    %500 = vmatpush1.msra.mxu0 %v492
    %501 = vmatprep.subr.mxu0 0.0
    %502 = vmatpush1.msra.mxu0 %v491
    %503 = vmatprep.subr.mxu0 0.0
    %504 = vmatpush1.msra.mxu0 %v490
    %505 = vmatprep.subr.mxu0 0.0
    %506 = vmatpush1.msra.mxu0 %v489
    %507 = vmatprep.subr.mxu0 0.0
    %508 = vmatpush1.msra.mxu0 %v488
    %509 = vmatprep.subr.mxu0 0.0
    %510 = vmatpush1.msra.mxu0 %v487
    %511 = vmatprep.subr.mxu0 0.0
    %512 = vmatpush1.msra.mxu0 %v486
    %513 = vmatprep.subr.mxu0 0.0
    %514 = vmatpush1.msra.mxu0 %v485
    %515 = vmatprep.subr.mxu0 0.0
    %516 = vmatpush1.msra.mxu0 %v484
    %517 = vmatprep.subr.mxu0 0.0
    %518 = vmatpush1.msra.mxu0 %v483
    %519 = vmatprep.subr.mxu0 0.0
    %520 = vmatpush1.msra.mxu0 %v482
    %521 = vmatprep.subr.mxu0 0.0
    %522 = vmatpush1.msra.mxu0 %v481
    %523 = vmatprep.subr.mxu0 0.0
    %524 = vmatpush1.msra.mxu0 %v480
    %525 = vmatprep.subr.mxu0 0.0
    %526 = vmatpush1.msra.mxu0 %v479
    %527 = vmatprep.subr.mxu0 0.0
    %528 = vmatpush2.msra.mxu0 0.0
    %529 = vmatprep.subr.mxu0 0.0
    %530 = vmatpush2.msra.mxu0 0.0
    %531 = vmatprep.subr.mxu0 0.0
    %532 = vmatpush2.msra.mxu0 0.0
    %533 = vmatprep.subr.mxu0 0.0
    %534 = vmatpush2.msra.mxu0 0.0
    %535 = vmatprep.subr.mxu0 0.0
    %536 = vmatpush2.msra.mxu0 0.0
    %537 = vmatprep.subr.mxu0 0.0
    %538 = vmatpush2.msra.mxu0 0.0
    %539 = vmatprep.subr.mxu0 0.0
    %540 = vmatpush2.msra.mxu0 0.0
    %541 = vmatprep.subr.mxu0 0.0
    %542 = vmatpush2.msra.mxu0 0.0
    %543 = vmatprep.subr.mxu0 0.0
    %544 = vmatpush2.msra.mxu0 0.0
    %545 = vmatprep.subr.mxu0 0.0
    %546 = vmatpush2.msra.mxu0 0.0
    %547 = vmatprep.subr.mxu0 0.0
    %548 = vmatpush2.msra.mxu0 0.0
    %549 = vmatprep.subr.mxu0 0.0
    %550 = vmatpush2.msra.mxu0 0.0
    %551 = vmatprep.subr.mxu0 0.0
    %552 = vmatpush2.msra.mxu0 0.0
    %553 = vmatprep.subr.mxu0 0.0
    %554 = vmatpush2.msra.mxu0 0.0
    %555 = vmatprep.subr.mxu0 0.0
    %556 = vmatpush2.msra.mxu0 0.0
    %557 = vmatprep.subr.mxu0 0.0
    %558 = vmatpush2.msra.mxu0 0.0
    %559 = vmatprep.mubr.f32.mxu0 0.0
    %560 = vmatmul.mubr.f32.gmra.mxu0 %v463
    %v561 = vpop.f32.mrf.mxu0
    %v562 = vadd.f32 0.0, %v561
    %v563 = vpop.f32.mrf.mxu0
    %564 = vmatprep.mubr.f32.mxu0 0.0
    %565 = vmatmul.mubr.f32.gmra.mxu0 %v464
    %v566 = vpop.f32.mrf.mxu0
    %v567 = vadd.f32 0.0, %v566
    %v568 = vpop.f32.mrf.mxu0
    %569 = vmatprep.mubr.f32.mxu0 0.0
    %570 = vmatmul.mubr.f32.gmra.mxu0 %v465
    %v571 = vpop.f32.mrf.mxu0
    %v572 = vadd.f32 0.0, %v571
    %v573 = vpop.f32.mrf.mxu0
    %574 = vmatprep.mubr.f32.mxu0 0.0
    %575 = vmatmul.mubr.f32.gmra.mxu0 %v466
    %v576 = vpop.f32.mrf.mxu0
    %v577 = vadd.f32 0.0, %v576
    %v578 = vpop.f32.mrf.mxu0
    %579 = vmatprep.mubr.f32.mxu0 0.0
    %580 = vmatmul.mubr.f32.gmra.mxu0 %v467
    %v581 = vpop.f32.mrf.mxu0
    %v582 = vadd.f32 0.0, %v581
    %v583 = vpop.f32.mrf.mxu0
    %584 = vmatprep.mubr.f32.mxu0 0.0
    %585 = vmatmul.mubr.f32.gmra.mxu0 %v468
    %v586 = vpop.f32.mrf.mxu0
    %v587 = vadd.f32 0.0, %v586
    %v588 = vpop.f32.mrf.mxu0
    %589 = vmatprep.mubr.f32.mxu0 0.0
    %590 = vmatmul.mubr.f32.gmra.mxu0 %v469
    %v591 = vpop.f32.mrf.mxu0
    %v592 = vadd.f32 0.0, %v591
    %v593 = vpop.f32.mrf.mxu0
    %594 = vmatprep.mubr.f32.mxu0 0.0
    %595 = vmatmul.mubr.f32.gmra.mxu0 %v470
    %v596 = vpop.f32.mrf.mxu0
    %v597 = vadd.f32 0.0, %v596
    %v598 = vpop.f32.mrf.mxu0
    %599 = vmatprep.mubr.f32.mxu0 0.0
    %600 = vmatmul.mubr.f32.gmra.mxu0 %v471
    %v601 = vpop.f32.mrf.mxu0
    %v602 = vadd.f32 0.0, %v601
    %v603 = vpop.f32.mrf.mxu0
    %604 = vmatprep.mubr.f32.mxu0 0.0
    %605 = vmatmul.mubr.f32.gmra.mxu0 %v472
    %v606 = vpop.f32.mrf.mxu0
    %v607 = vadd.f32 0.0, %v606
    %v608 = vpop.f32.mrf.mxu0
    %609 = vmatprep.mubr.f32.mxu0 0.0
    %610 = vmatmul.mubr.f32.gmra.mxu0 %v473
    %v611 = vpop.f32.mrf.mxu0
    %v612 = vadd.f32 0.0, %v611
    %v613 = vpop.f32.mrf.mxu0
    %614 = vmatprep.mubr.f32.mxu0 0.0
    %615 = vmatmul.mubr.f32.gmra.mxu0 %v474
    %v616 = vpop.f32.mrf.mxu0
    %v617 = vadd.f32 0.0, %v616
    %v618 = vpop.f32.mrf.mxu0
    %619 = vmatprep.mubr.f32.mxu0 0.0
    %620 = vmatmul.mubr.f32.gmra.mxu0 %v475
    %v621 = vpop.f32.mrf.mxu0
    %v622 = vadd.f32 0.0, %v621
    %v623 = vpop.f32.mrf.mxu0
    %624 = vmatprep.mubr.f32.mxu0 0.0
    %625 = vmatmul.mubr.f32.gmra.mxu0 %v476
    %v626 = vpop.f32.mrf.mxu0
    %v627 = vadd.f32 0.0, %v626
    %v628 = vpop.f32.mrf.mxu0
    %629 = vmatprep.mubr.f32.mxu0 0.0
    %630 = vmatmul.mubr.f32.gmra.mxu0 %v477
    %v631 = vpop.f32.mrf.mxu0
    %v632 = vadd.f32 0.0, %v631
    %v633 = vpop.f32.mrf.mxu0
    %634 = vmatprep.mubr.f32.mxu0 0.0
    %635 = vmatmul.mubr.f32.gmra.mxu0 %v478
    %v636 = vpop.f32.mrf.mxu0
    %v637 = vadd.f32 0.0, %v636
    %v638 = vpop.f32.mrf.mxu0
    %639 = vdwg.mxu0
    %640 = vmatprep.subr.mxu0 0.0
    %641 = vmatpush1.msra.mxu0 %v637
    %642 = vmatprep.subr.mxu0 0.0
    %643 = vmatpush1.msra.mxu0 %v632
    %644 = vmatprep.subr.mxu0 0.0
    %645 = vmatpush1.msra.mxu0 %v627
    %646 = vmatprep.subr.mxu0 0.0
    %647 = vmatpush1.msra.mxu0 %v622
    %648 = vmatprep.subr.mxu0 0.0
    %649 = vmatpush1.msra.mxu0 %v617
    %650 = vmatprep.subr.mxu0 0.0
    %651 = vmatpush1.msra.mxu0 %v612
    %652 = vmatprep.subr.mxu0 0.0
    %653 = vmatpush1.msra.mxu0 %v607
    %654 = vmatprep.subr.mxu0 0.0
    %655 = vmatpush1.msra.mxu0 %v602
    %656 = vmatprep.subr.mxu0 0.0
    %657 = vmatpush1.msra.mxu0 %v597
    %658 = vmatprep.subr.mxu0 0.0
    %659 = vmatpush1.msra.mxu0 %v592
    %660 = vmatprep.subr.mxu0 0.0
    %661 = vmatpush1.msra.mxu0 %v587
    %662 = vmatprep.subr.mxu0 0.0
    %663 = vmatpush1.msra.mxu0 %v582
    %664 = vmatprep.subr.mxu0 0.0
    %665 = vmatpush1.msra.mxu0 %v577
    %666 = vmatprep.subr.mxu0 0.0
    %667 = vmatpush1.msra.mxu0 %v572
    %668 = vmatprep.subr.mxu0 0.0
    %669 = vmatpush1.msra.mxu0 %v567
    %670 = vmatprep.subr.mxu0 0.0
    %671 = vmatpush1.msra.mxu0 %v562
    %672 = vmatprep.subr.mxu0 0.0
    %673 = vmatpush2.msra.mxu0 0.0
    %674 = vmatprep.subr.mxu0 0.0
    %675 = vmatpush2.msra.mxu0 0.0
    %676 = vmatprep.subr.mxu0 0.0
    %677 = vmatpush2.msra.mxu0 0.0
    %678 = vmatprep.subr.mxu0 0.0
    %679 = vmatpush2.msra.mxu0 0.0
    %680 = vmatprep.subr.mxu0 0.0
    %681 = vmatpush2.msra.mxu0 0.0
    %682 = vmatprep.subr.mxu0 0.0
    %683 = vmatpush2.msra.mxu0 0.0
    %684 = vmatprep.subr.mxu0 0.0
    %685 = vmatpush2.msra.mxu0 0.0
    %686 = vmatprep.subr.mxu0 0.0
    %687 = vmatpush2.msra.mxu0 0.0
    %688 = vmatprep.subr.mxu0 0.0
    %689 = vmatpush2.msra.mxu0 0.0
    %690 = vmatprep.subr.mxu0 0.0
    %691 = vmatpush2.msra.mxu0 0.0
    %692 = vmatprep.subr.mxu0 0.0
    %693 = vmatpush2.msra.mxu0 0.0
    %694 = vmatprep.subr.mxu0 0.0
    %695 = vmatpush2.msra.mxu0 0.0
    %696 = vmatprep.subr.mxu0 0.0
    %697 = vmatpush2.msra.mxu0 0.0
    %698 = vmatprep.subr.mxu0 0.0
    %699 = vmatpush2.msra.mxu0 0.0
    %700 = vmatprep.subr.mxu0 0.0
    %701 = vmatpush2.msra.mxu0 0.0
    %702 = vmatprep.subr.mxu0 0.0
    %703 = vmatpush2.msra.mxu0 0.0
    %704 = vmatprep.mubr.f32.mxu0 0.0
    %705 = vmatmul.mubr.f32.gmra.mxu0 %v125
    %v706 = vpop.f32.mrf.mxu0
    %v707 = vadd.f32 0.0, %v706
    %v708 = vpop.f32.mrf.mxu0
    %709 = vmatprep.mubr.f32.mxu0 0.0
    %710 = vmatmul.mubr.f32.gmra.mxu0 %v126
    %v711 = vpop.f32.mrf.mxu0
    %v712 = vadd.f32 0.0, %v711
    %v713 = vpop.f32.mrf.mxu0
    %714 = vmatprep.mubr.f32.mxu0 0.0
    %715 = vmatmul.mubr.f32.gmra.mxu0 %v127
    %v716 = vpop.f32.mrf.mxu0
    %v717 = vadd.f32 0.0, %v716
    %v718 = vpop.f32.mrf.mxu0
    %719 = vmatprep.mubr.f32.mxu0 0.0
    %720 = vmatmul.mubr.f32.gmra.mxu0 %v128
    %v721 = vpop.f32.mrf.mxu0
    %v722 = vadd.f32 0.0, %v721
    %v723 = vpop.f32.mrf.mxu0
    %724 = vmatprep.mubr.f32.mxu0 0.0
    %725 = vmatmul.mubr.f32.gmra.mxu0 %v129
    %v726 = vpop.f32.mrf.mxu0
    %v727 = vadd.f32 0.0, %v726
    %v728 = vpop.f32.mrf.mxu0
    %729 = vmatprep.mubr.f32.mxu0 0.0
    %730 = vmatmul.mubr.f32.gmra.mxu0 %v130
    %v731 = vpop.f32.mrf.mxu0
    %v732 = vadd.f32 0.0, %v731
    %v733 = vpop.f32.mrf.mxu0
    %734 = vmatprep.mubr.f32.mxu0 0.0
    %735 = vmatmul.mubr.f32.gmra.mxu0 %v131
    %v736 = vpop.f32.mrf.mxu0
    %v737 = vadd.f32 0.0, %v736
    %v738 = vpop.f32.mrf.mxu0
    %739 = vmatprep.mubr.f32.mxu0 0.0
    %740 = vmatmul.mubr.f32.gmra.mxu0 %v132
    %v741 = vpop.f32.mrf.mxu0
    %v742 = vadd.f32 0.0, %v741
    %v743 = vpop.f32.mrf.mxu0
    %744 = vmatprep.mubr.f32.mxu0 0.0
    %745 = vmatmul.mubr.f32.gmra.mxu0 %v133
    %v746 = vpop.f32.mrf.mxu0
    %v747 = vadd.f32 0.0, %v746
    %v748 = vpop.f32.mrf.mxu0
    %749 = vmatprep.mubr.f32.mxu0 0.0
    %750 = vmatmul.mubr.f32.gmra.mxu0 %v134
    %v751 = vpop.f32.mrf.mxu0
    %v752 = vadd.f32 0.0, %v751
    %v753 = vpop.f32.mrf.mxu0
    %754 = vmatprep.mubr.f32.mxu0 0.0
    %755 = vmatmul.mubr.f32.gmra.mxu0 %v135
    %v756 = vpop.f32.mrf.mxu0
    %v757 = vadd.f32 0.0, %v756
    %v758 = vpop.f32.mrf.mxu0
    %759 = vmatprep.mubr.f32.mxu0 0.0
    %760 = vmatmul.mubr.f32.gmra.mxu0 %v136
    %v761 = vpop.f32.mrf.mxu0
    %v762 = vadd.f32 0.0, %v761
    %v763 = vpop.f32.mrf.mxu0
    %764 = vmatprep.mubr.f32.mxu0 0.0
    %765 = vmatmul.mubr.f32.gmra.mxu0 %v137
    %v766 = vpop.f32.mrf.mxu0
    %v767 = vadd.f32 0.0, %v766
    %v768 = vpop.f32.mrf.mxu0
    %769 = vmatprep.mubr.f32.mxu0 0.0
    %770 = vmatmul.mubr.f32.gmra.mxu0 %v138
    %v771 = vpop.f32.mrf.mxu0
    %v772 = vadd.f32 0.0, %v771
    %v773 = vpop.f32.mrf.mxu0
    %774 = vmatprep.mubr.f32.mxu0 0.0
    %775 = vmatmul.mubr.f32.gmra.mxu0 %v139
    %v776 = vpop.f32.mrf.mxu0
    %v777 = vadd.f32 0.0, %v776
    %v778 = vpop.f32.mrf.mxu0
    %779 = vmatprep.mubr.f32.mxu0 0.0
    %780 = vmatmul.mubr.f32.gmra.mxu0 %v140
    %v781 = vpop.f32.mrf.mxu0
    %v782 = vadd.f32 0.0, %v781
    %v783 = vpop.f32.mrf.mxu0
    %784 = vdwg.mxu0
    %v785 = vmax.f32 %v707, 0.0
    %v786 = vmax.f32 %v712, 0.0
    %v787 = vmax.f32 %v717, 0.0
    %v788 = vmax.f32 %v722, 0.0
    %v789 = vmax.f32 %v727, 0.0
    %v790 = vmax.f32 %v732, 0.0
    %v791 = vmax.f32 %v737, 0.0
    %v792 = vmax.f32 %v742, 0.0
    %v793 = vmax.f32 %v747, 0.0
    %v794 = vmax.f32 %v752, 0.0
    %v795 = vmax.f32 %v757, 0.0
    %v796 = vmax.f32 %v762, 0.0
    %v797 = vmax.f32 %v767, 0.0
    %v798 = vmax.f32 %v772, 0.0
    %v799 = vmax.f32 %v777, 0.0
    %v800 = vmax.f32 %v782, 0.0
    %v801 = vld [vmem:[#allocation11] sm:$0xff]
    %v802 = vld [vmem:[#allocation11 + $0x8] sm:$0xff]
    %v803 = vld [vmem:[#allocation11 + $0x10] sm:$0xff]
    %v804 = vld [vmem:[#allocation11 + $0x18] sm:$0xff]
    %v805 = vld [vmem:[#allocation11 + $0x20] sm:$0xff]
    %v806 = vld [vmem:[#allocation11 + $0x28] sm:$0xff]
    %v807 = vld [vmem:[#allocation11 + $0x30] sm:$0xff]
    %v808 = vld [vmem:[#allocation11 + $0x38] sm:$0xff]
    %v809 = vld [vmem:[#allocation11 + $0x40] sm:$0xff]
    %v810 = vld [vmem:[#allocation11 + $0x48] sm:$0xff]
    %v811 = vld [vmem:[#allocation11 + $0x50] sm:$0xff]
    %v812 = vld [vmem:[#allocation11 + $0x58] sm:$0xff]
    %v813 = vld [vmem:[#allocation11 + $0x60] sm:$0xff]
    %v814 = vld [vmem:[#allocation11 + $0x68] sm:$0xff]
    %v815 = vld [vmem:[#allocation11 + $0x70] sm:$0xff]
    %v816 = vld [vmem:[#allocation11 + $0x78] sm:$0xff]
    %817 = vmatprep.subr.mxu0 0.0
    %818 = vmatpush1.msra.mxu0 %v816
    %819 = vmatprep.subr.mxu0 0.0
    %820 = vmatpush1.msra.mxu0 %v815
    %821 = vmatprep.subr.mxu0 0.0
    %822 = vmatpush1.msra.mxu0 %v814
    %823 = vmatprep.subr.mxu0 0.0
    %824 = vmatpush1.msra.mxu0 %v813
    %825 = vmatprep.subr.mxu0 0.0
    %826 = vmatpush1.msra.mxu0 %v812
    %827 = vmatprep.subr.mxu0 0.0
    %828 = vmatpush1.msra.mxu0 %v811
    %829 = vmatprep.subr.mxu0 0.0
    %830 = vmatpush1.msra.mxu0 %v810
    %831 = vmatprep.subr.mxu0 0.0
    %832 = vmatpush1.msra.mxu0 %v809
    %833 = vmatprep.subr.mxu0 0.0
    %834 = vmatpush1.msra.mxu0 %v808
    %835 = vmatprep.subr.mxu0 0.0
    %836 = vmatpush1.msra.mxu0 %v807
    %837 = vmatprep.subr.mxu0 0.0
    %838 = vmatpush1.msra.mxu0 %v806
    %839 = vmatprep.subr.mxu0 0.0
    %840 = vmatpush1.msra.mxu0 %v805
    %841 = vmatprep.subr.mxu0 0.0
    %842 = vmatpush1.msra.mxu0 %v804
    %843 = vmatprep.subr.mxu0 0.0
    %844 = vmatpush1.msra.mxu0 %v803
    %845 = vmatprep.subr.mxu0 0.0
    %846 = vmatpush1.msra.mxu0 %v802
    %847 = vmatprep.subr.mxu0 0.0
    %848 = vmatpush1.msra.mxu0 %v801
    %849 = vmatprep.subr.mxu0 0.0
    %850 = vmatpush2.msra.mxu0 0.0
    %851 = vmatprep.subr.mxu0 0.0
    %852 = vmatpush2.msra.mxu0 0.0
    %853 = vmatprep.subr.mxu0 0.0
    %854 = vmatpush2.msra.mxu0 0.0
    %855 = vmatprep.subr.mxu0 0.0
    %856 = vmatpush2.msra.mxu0 0.0
    %857 = vmatprep.subr.mxu0 0.0
    %858 = vmatpush2.msra.mxu0 0.0
    %859 = vmatprep.subr.mxu0 0.0
    %860 = vmatpush2.msra.mxu0 0.0
    %861 = vmatprep.subr.mxu0 0.0
    %862 = vmatpush2.msra.mxu0 0.0
    %863 = vmatprep.subr.mxu0 0.0
    %864 = vmatpush2.msra.mxu0 0.0
    %865 = vmatprep.subr.mxu0 0.0
    %866 = vmatpush2.msra.mxu0 0.0
    %867 = vmatprep.subr.mxu0 0.0
    %868 = vmatpush2.msra.mxu0 0.0
    %869 = vmatprep.subr.mxu0 0.0
    %870 = vmatpush2.msra.mxu0 0.0
    %871 = vmatprep.subr.mxu0 0.0
    %872 = vmatpush2.msra.mxu0 0.0
    %873 = vmatprep.subr.mxu0 0.0
    %874 = vmatpush2.msra.mxu0 0.0
    %875 = vmatprep.subr.mxu0 0.0
    %876 = vmatpush2.msra.mxu0 0.0
    %877 = vmatprep.subr.mxu0 0.0
    %878 = vmatpush2.msra.mxu0 0.0
    %879 = vmatprep.subr.mxu0 0.0
    %880 = vmatpush2.msra.mxu0 0.0
    %881 = vmatprep.mubr.f32.mxu0 0.0
    %882 = vmatmul.mubr.f32.gmra.mxu0 %v785
    %v883 = vpop.f32.mrf.mxu0
    %v884 = vadd.f32 0.0, %v883
    %v885 = vpop.f32.mrf.mxu0
    %886 = vmatprep.mubr.f32.mxu0 0.0
    %887 = vmatmul.mubr.f32.gmra.mxu0 %v786
    %v888 = vpop.f32.mrf.mxu0
    %v889 = vadd.f32 0.0, %v888
    %v890 = vpop.f32.mrf.mxu0
    %891 = vmatprep.mubr.f32.mxu0 0.0
    %892 = vmatmul.mubr.f32.gmra.mxu0 %v787
    %v893 = vpop.f32.mrf.mxu0
    %v894 = vadd.f32 0.0, %v893
    %v895 = vpop.f32.mrf.mxu0
    %896 = vmatprep.mubr.f32.mxu0 0.0
    %897 = vmatmul.mubr.f32.gmra.mxu0 %v788
    %v898 = vpop.f32.mrf.mxu0
    %v899 = vadd.f32 0.0, %v898
    %v900 = vpop.f32.mrf.mxu0
    %901 = vmatprep.mubr.f32.mxu0 0.0
    %902 = vmatmul.mubr.f32.gmra.mxu0 %v789
    %v903 = vpop.f32.mrf.mxu0
    %v904 = vadd.f32 0.0, %v903
    %v905 = vpop.f32.mrf.mxu0
    %906 = vmatprep.mubr.f32.mxu0 0.0
    %907 = vmatmul.mubr.f32.gmra.mxu0 %v790
    %v908 = vpop.f32.mrf.mxu0
    %v909 = vadd.f32 0.0, %v908
    %v910 = vpop.f32.mrf.mxu0
    %911 = vmatprep.mubr.f32.mxu0 0.0
    %912 = vmatmul.mubr.f32.gmra.mxu0 %v791
    %v913 = vpop.f32.mrf.mxu0
    %v914 = vadd.f32 0.0, %v913
    %v915 = vpop.f32.mrf.mxu0
    %916 = vmatprep.mubr.f32.mxu0 0.0
    %917 = vmatmul.mubr.f32.gmra.mxu0 %v792
    %v918 = vpop.f32.mrf.mxu0
    %v919 = vadd.f32 0.0, %v918
    %v920 = vpop.f32.mrf.mxu0
    %921 = vmatprep.mubr.f32.mxu0 0.0
    %922 = vmatmul.mubr.f32.gmra.mxu0 %v793
    %v923 = vpop.f32.mrf.mxu0
    %v924 = vadd.f32 0.0, %v923
    %v925 = vpop.f32.mrf.mxu0
    %926 = vmatprep.mubr.f32.mxu0 0.0
    %927 = vmatmul.mubr.f32.gmra.mxu0 %v794
    %v928 = vpop.f32.mrf.mxu0
    %v929 = vadd.f32 0.0, %v928
    %v930 = vpop.f32.mrf.mxu0
    %931 = vmatprep.mubr.f32.mxu0 0.0
    %932 = vmatmul.mubr.f32.gmra.mxu0 %v795
    %v933 = vpop.f32.mrf.mxu0
    %v934 = vadd.f32 0.0, %v933
    %v935 = vpop.f32.mrf.mxu0
    %936 = vmatprep.mubr.f32.mxu0 0.0
    %937 = vmatmul.mubr.f32.gmra.mxu0 %v796
    %v938 = vpop.f32.mrf.mxu0
    %v939 = vadd.f32 0.0, %v938
    %v940 = vpop.f32.mrf.mxu0
    %941 = vmatprep.mubr.f32.mxu0 0.0
    %942 = vmatmul.mubr.f32.gmra.mxu0 %v797
    %v943 = vpop.f32.mrf.mxu0
    %v944 = vadd.f32 0.0, %v943
    %v945 = vpop.f32.mrf.mxu0
    %946 = vmatprep.mubr.f32.mxu0 0.0
    %947 = vmatmul.mubr.f32.gmra.mxu0 %v798
    %v948 = vpop.f32.mrf.mxu0
    %v949 = vadd.f32 0.0, %v948
    %v950 = vpop.f32.mrf.mxu0
    %951 = vmatprep.mubr.f32.mxu0 0.0
    %952 = vmatmul.mubr.f32.gmra.mxu0 %v799
    %v953 = vpop.f32.mrf.mxu0
    %v954 = vadd.f32 0.0, %v953
    %v955 = vpop.f32.mrf.mxu0
    %956 = vmatprep.mubr.f32.mxu0 0.0
    %957 = vmatmul.mubr.f32.gmra.mxu0 %v800
    %v958 = vpop.f32.mrf.mxu0
    %v959 = vadd.f32 0.0, %v958
    %v960 = vpop.f32.mrf.mxu0
    %961 = vdwg.mxu0
    %962 = vmatprep.subr.mxu0 0.0
    %963 = vmatpush1.msra.mxu0 %v959
    %964 = vmatprep.subr.mxu0 0.0
    %965 = vmatpush1.msra.mxu0 %v954
    %966 = vmatprep.subr.mxu0 0.0
    %967 = vmatpush1.msra.mxu0 %v949
    %968 = vmatprep.subr.mxu0 0.0
    %969 = vmatpush1.msra.mxu0 %v944
    %970 = vmatprep.subr.mxu0 0.0
    %971 = vmatpush1.msra.mxu0 %v939
    %972 = vmatprep.subr.mxu0 0.0
    %973 = vmatpush1.msra.mxu0 %v934
    %974 = vmatprep.subr.mxu0 0.0
    %975 = vmatpush1.msra.mxu0 %v929
    %976 = vmatprep.subr.mxu0 0.0
    %977 = vmatpush1.msra.mxu0 %v924
    %978 = vmatprep.subr.mxu0 0.0
    %979 = vmatpush1.msra.mxu0 %v919
    %980 = vmatprep.subr.mxu0 0.0
    %981 = vmatpush1.msra.mxu0 %v914
    %982 = vmatprep.subr.mxu0 0.0
    %983 = vmatpush1.msra.mxu0 %v909
    %984 = vmatprep.subr.mxu0 0.0
    %985 = vmatpush1.msra.mxu0 %v904
    %986 = vmatprep.subr.mxu0 0.0
    %987 = vmatpush1.msra.mxu0 %v899
    %988 = vmatprep.subr.mxu0 0.0
    %989 = vmatpush1.msra.mxu0 %v894
    %990 = vmatprep.subr.mxu0 0.0
    %991 = vmatpush1.msra.mxu0 %v889
    %992 = vmatprep.subr.mxu0 0.0
    %993 = vmatpush1.msra.mxu0 %v884
    %994 = vmatprep.subr.mxu0 0.0
    %995 = vmatpush2.msra.mxu0 0.0
    %996 = vmatprep.subr.mxu0 0.0
    %997 = vmatpush2.msra.mxu0 0.0
    %998 = vmatprep.subr.mxu0 0.0
    %999 = vmatpush2.msra.mxu0 0.0
    %1000 = vmatprep.subr.mxu0 0.0
    %1001 = vmatpush2.msra.mxu0 0.0
    %1002 = vmatprep.subr.mxu0 0.0
    %1003 = vmatpush2.msra.mxu0 0.0
    %1004 = vmatprep.subr.mxu0 0.0
    %1005 = vmatpush2.msra.mxu0 0.0
    %1006 = vmatprep.subr.mxu0 0.0
    %1007 = vmatpush2.msra.mxu0 0.0
    %1008 = vmatprep.subr.mxu0 0.0
    %1009 = vmatpush2.msra.mxu0 0.0
    %1010 = vmatprep.subr.mxu0 0.0
    %1011 = vmatpush2.msra.mxu0 0.0
    %1012 = vmatprep.subr.mxu0 0.0
    %1013 = vmatpush2.msra.mxu0 0.0
    %1014 = vmatprep.subr.mxu0 0.0
    %1015 = vmatpush2.msra.mxu0 0.0
    %1016 = vmatprep.subr.mxu0 0.0
    %1017 = vmatpush2.msra.mxu0 0.0
    %1018 = vmatprep.subr.mxu0 0.0
    %1019 = vmatpush2.msra.mxu0 0.0
    %1020 = vmatprep.subr.mxu0 0.0
    %1021 = vmatpush2.msra.mxu0 0.0
    %1022 = vmatprep.subr.mxu0 0.0
    %1023 = vmatpush2.msra.mxu0 0.0
    %1024 = vmatprep.subr.mxu0 0.0
    %1025 = vmatpush2.msra.mxu0 0.0
    %1026 = vmatprep.mubr.f32.mxu0 0.0
    %1027 = vmatmul.mubr.f32.gmra.mxu0 %v125
    %v1028 = vpop.f32.mrf.mxu0
    %v1029 = vadd.f32 0.0, %v1028
    %v1030 = vpop.f32.mrf.mxu0
    %1031 = vmatprep.mubr.f32.mxu0 0.0
    %1032 = vmatmul.mubr.f32.gmra.mxu0 %v126
    %v1033 = vpop.f32.mrf.mxu0
    %v1034 = vadd.f32 0.0, %v1033
    %v1035 = vpop.f32.mrf.mxu0
    %1036 = vmatprep.mubr.f32.mxu0 0.0
    %1037 = vmatmul.mubr.f32.gmra.mxu0 %v127
    %v1038 = vpop.f32.mrf.mxu0
    %v1039 = vadd.f32 0.0, %v1038
    %v1040 = vpop.f32.mrf.mxu0
    %1041 = vmatprep.mubr.f32.mxu0 0.0
    %1042 = vmatmul.mubr.f32.gmra.mxu0 %v128
    %v1043 = vpop.f32.mrf.mxu0
    %v1044 = vadd.f32 0.0, %v1043
    %v1045 = vpop.f32.mrf.mxu0
    %1046 = vmatprep.mubr.f32.mxu0 0.0
    %1047 = vmatmul.mubr.f32.gmra.mxu0 %v129
    %v1048 = vpop.f32.mrf.mxu0
    %v1049 = vadd.f32 0.0, %v1048
    %v1050 = vpop.f32.mrf.mxu0
    %1051 = vmatprep.mubr.f32.mxu0 0.0
    %1052 = vmatmul.mubr.f32.gmra.mxu0 %v130
    %v1053 = vpop.f32.mrf.mxu0
    %v1054 = vadd.f32 0.0, %v1053
    %v1055 = vpop.f32.mrf.mxu0
    %1056 = vmatprep.mubr.f32.mxu0 0.0
    %1057 = vmatmul.mubr.f32.gmra.mxu0 %v131
    %v1058 = vpop.f32.mrf.mxu0
    %v1059 = vadd.f32 0.0, %v1058
    %v1060 = vpop.f32.mrf.mxu0
    %1061 = vmatprep.mubr.f32.mxu0 0.0
    %1062 = vmatmul.mubr.f32.gmra.mxu0 %v132
    %v1063 = vpop.f32.mrf.mxu0
    %v1064 = vadd.f32 0.0, %v1063
    %v1065 = vpop.f32.mrf.mxu0
    %1066 = vmatprep.mubr.f32.mxu0 0.0
    %1067 = vmatmul.mubr.f32.gmra.mxu0 %v133
    %v1068 = vpop.f32.mrf.mxu0
    %v1069 = vadd.f32 0.0, %v1068
    %v1070 = vpop.f32.mrf.mxu0
    %1071 = vmatprep.mubr.f32.mxu0 0.0
    %1072 = vmatmul.mubr.f32.gmra.mxu0 %v134
    %v1073 = vpop.f32.mrf.mxu0
    %v1074 = vadd.f32 0.0, %v1073
    %v1075 = vpop.f32.mrf.mxu0
    %1076 = vmatprep.mubr.f32.mxu0 0.0
    %1077 = vmatmul.mubr.f32.gmra.mxu0 %v135
    %v1078 = vpop.f32.mrf.mxu0
    %v1079 = vadd.f32 0.0, %v1078
    %v1080 = vpop.f32.mrf.mxu0
    %1081 = vmatprep.mubr.f32.mxu0 0.0
    %1082 = vmatmul.mubr.f32.gmra.mxu0 %v136
    %v1083 = vpop.f32.mrf.mxu0
    %v1084 = vadd.f32 0.0, %v1083
    %v1085 = vpop.f32.mrf.mxu0
    %1086 = vmatprep.mubr.f32.mxu0 0.0
    %1087 = vmatmul.mubr.f32.gmra.mxu0 %v137
    %v1088 = vpop.f32.mrf.mxu0
    %v1089 = vadd.f32 0.0, %v1088
    %v1090 = vpop.f32.mrf.mxu0
    %1091 = vmatprep.mubr.f32.mxu0 0.0
    %1092 = vmatmul.mubr.f32.gmra.mxu0 %v138
    %v1093 = vpop.f32.mrf.mxu0
    %v1094 = vadd.f32 0.0, %v1093
    %v1095 = vpop.f32.mrf.mxu0
    %1096 = vmatprep.mubr.f32.mxu0 0.0
    %1097 = vmatmul.mubr.f32.gmra.mxu0 %v139
    %v1098 = vpop.f32.mrf.mxu0
    %v1099 = vadd.f32 0.0, %v1098
    %v1100 = vpop.f32.mrf.mxu0
    %1101 = vmatprep.mubr.f32.mxu0 0.0
    %1102 = vmatmul.mubr.f32.gmra.mxu0 %v140
    %v1103 = vpop.f32.mrf.mxu0
    %v1104 = vadd.f32 0.0, %v1103
    %v1105 = vpop.f32.mrf.mxu0
    %1106 = vdwg.mxu0
    %v1107 = vmax.f32 %v1029, 0.0
    %v1108 = vmax.f32 %v1034, 0.0
    %v1109 = vmax.f32 %v1039, 0.0
    %v1110 = vmax.f32 %v1044, 0.0
    %v1111 = vmax.f32 %v1049, 0.0
    %v1112 = vmax.f32 %v1054, 0.0
    %v1113 = vmax.f32 %v1059, 0.0
    %v1114 = vmax.f32 %v1064, 0.0
    %v1115 = vmax.f32 %v1069, 0.0
    %v1116 = vmax.f32 %v1074, 0.0
    %v1117 = vmax.f32 %v1079, 0.0
    %v1118 = vmax.f32 %v1084, 0.0
    %v1119 = vmax.f32 %v1089, 0.0
    %v1120 = vmax.f32 %v1094, 0.0
    %v1121 = vmax.f32 %v1099, 0.0
    %v1122 = vmax.f32 %v1104, 0.0
    %v1123 = vld [vmem:[#allocation13] sm:$0xff]
    %v1124 = vld [vmem:[#allocation13 + $0x8] sm:$0xff]
    %v1125 = vld [vmem:[#allocation13 + $0x10] sm:$0xff]
    %v1126 = vld [vmem:[#allocation13 + $0x18] sm:$0xff]
    %v1127 = vld [vmem:[#allocation13 + $0x20] sm:$0xff]
    %v1128 = vld [vmem:[#allocation13 + $0x28] sm:$0xff]
    %v1129 = vld [vmem:[#allocation13 + $0x30] sm:$0xff]
    %v1130 = vld [vmem:[#allocation13 + $0x38] sm:$0xff]
    %v1131 = vld [vmem:[#allocation13 + $0x40] sm:$0xff]
    %v1132 = vld [vmem:[#allocation13 + $0x48] sm:$0xff]
    %v1133 = vld [vmem:[#allocation13 + $0x50] sm:$0xff]
    %v1134 = vld [vmem:[#allocation13 + $0x58] sm:$0xff]
    %v1135 = vld [vmem:[#allocation13 + $0x60] sm:$0xff]
    %v1136 = vld [vmem:[#allocation13 + $0x68] sm:$0xff]
    %v1137 = vld [vmem:[#allocation13 + $0x70] sm:$0xff]
    %v1138 = vld [vmem:[#allocation13 + $0x78] sm:$0xff]
    %v1139 = vld [vmem:[#allocation13 + $0x80] sm:$0xff]
    %v1140 = vld [vmem:[#allocation13 + $0x88] sm:$0xff]
    %v1141 = vld [vmem:[#allocation13 + $0x90] sm:$0xff]
    %v1142 = vld [vmem:[#allocation13 + $0x98] sm:$0xff]
    %v1143 = vld [vmem:[#allocation13 + $0xa0] sm:$0xff]
    %v1144 = vld [vmem:[#allocation13 + $0xa8] sm:$0xff]
    %v1145 = vld [vmem:[#allocation13 + $0xb0] sm:$0xff]
    %v1146 = vld [vmem:[#allocation13 + $0xb8] sm:$0xff]
    %v1147 = vld [vmem:[#allocation13 + $0xc0] sm:$0xff]
    %v1148 = vld [vmem:[#allocation13 + $0xc8] sm:$0xff]
    %v1149 = vld [vmem:[#allocation13 + $0xd0] sm:$0xff]
    %v1150 = vld [vmem:[#allocation13 + $0xd8] sm:$0xff]
    %v1151 = vld [vmem:[#allocation13 + $0xe0] sm:$0xff]
    %v1152 = vld [vmem:[#allocation13 + $0xe8] sm:$0xff]
    %v1153 = vld [vmem:[#allocation13 + $0xf0] sm:$0xff]
    %v1154 = vld [vmem:[#allocation13 + $0xf8] sm:$0xff]
    %1155 = vmatprep.subr.mxu0 %v1154
    %1156 = vmatpush1.msra.mxu0 %v1153
    %1157 = vmatprep.subr.mxu0 %v1152
    %1158 = vmatpush1.msra.mxu0 %v1151
    %1159 = vmatprep.subr.mxu0 %v1150
    %1160 = vmatpush1.msra.mxu0 %v1149
    %1161 = vmatprep.subr.mxu0 %v1148
    %1162 = vmatpush1.msra.mxu0 %v1147
    %1163 = vmatprep.subr.mxu0 %v1146
    %1164 = vmatpush1.msra.mxu0 %v1145
    %1165 = vmatprep.subr.mxu0 %v1144
    %1166 = vmatpush1.msra.mxu0 %v1143
    %1167 = vmatprep.subr.mxu0 %v1142
    %1168 = vmatpush1.msra.mxu0 %v1141
    %1169 = vmatprep.subr.mxu0 %v1140
    %1170 = vmatpush1.msra.mxu0 %v1139
    %1171 = vmatprep.subr.mxu0 %v1138
    %1172 = vmatpush1.msra.mxu0 %v1137
    %1173 = vmatprep.subr.mxu0 %v1136
    %1174 = vmatpush1.msra.mxu0 %v1135
    %1175 = vmatprep.subr.mxu0 %v1134
    %1176 = vmatpush1.msra.mxu0 %v1133
    %1177 = vmatprep.subr.mxu0 %v1132
    %1178 = vmatpush1.msra.mxu0 %v1131
    %1179 = vmatprep.subr.mxu0 %v1130
    %1180 = vmatpush1.msra.mxu0 %v1129
    %1181 = vmatprep.subr.mxu0 %v1128
    %1182 = vmatpush1.msra.mxu0 %v1127
    %1183 = vmatprep.subr.mxu0 %v1126
    %1184 = vmatpush1.msra.mxu0 %v1125
    %1185 = vmatprep.subr.mxu0 %v1124
    %1186 = vmatpush1.msra.mxu0 %v1123
    %1187 = vmatprep.subr.mxu0 0.0
    %1188 = vmatpush2.msra.mxu0 0.0
    %1189 = vmatprep.subr.mxu0 0.0
    %1190 = vmatpush2.msra.mxu0 0.0
    %1191 = vmatprep.subr.mxu0 0.0
    %1192 = vmatpush2.msra.mxu0 0.0
    %1193 = vmatprep.subr.mxu0 0.0
    %1194 = vmatpush2.msra.mxu0 0.0
    %1195 = vmatprep.subr.mxu0 0.0
    %1196 = vmatpush2.msra.mxu0 0.0
    %1197 = vmatprep.subr.mxu0 0.0
    %1198 = vmatpush2.msra.mxu0 0.0
    %1199 = vmatprep.subr.mxu0 0.0
    %1200 = vmatpush2.msra.mxu0 0.0
    %1201 = vmatprep.subr.mxu0 0.0
    %1202 = vmatpush2.msra.mxu0 0.0
    %1203 = vmatprep.subr.mxu0 0.0
    %1204 = vmatpush2.msra.mxu0 0.0
    %1205 = vmatprep.subr.mxu0 0.0
    %1206 = vmatpush2.msra.mxu0 0.0
    %1207 = vmatprep.subr.mxu0 0.0
    %1208 = vmatpush2.msra.mxu0 0.0
    %1209 = vmatprep.subr.mxu0 0.0
    %1210 = vmatpush2.msra.mxu0 0.0
    %1211 = vmatprep.subr.mxu0 0.0
    %1212 = vmatpush2.msra.mxu0 0.0
    %1213 = vmatprep.subr.mxu0 0.0
    %1214 = vmatpush2.msra.mxu0 0.0
    %1215 = vmatprep.subr.mxu0 0.0
    %1216 = vmatpush2.msra.mxu0 0.0
    %1217 = vmatprep.subr.mxu0 0.0
    %1218 = vmatpush2.msra.mxu0 0.0
    %1219 = vmatprep.mubr.f32.mxu0 0.0
    %1220 = vmatmul.mubr.f32.gmra.mxu0 %v1107
    %v1221 = vpop.f32.mrf.mxu0
    %v1222 = vadd.f32 0.0, %v1221
    %v1223 = vpop.f32.mrf.mxu0
    %v1224 = vadd.f32 0.0, %v1223
    %1225 = vmatprep.mubr.f32.mxu0 0.0
    %1226 = vmatmul.mubr.f32.gmra.mxu0 %v1108
    %v1227 = vpop.f32.mrf.mxu0
    %v1228 = vadd.f32 0.0, %v1227
    %v1229 = vpop.f32.mrf.mxu0
    %v1230 = vadd.f32 0.0, %v1229
    %1231 = vmatprep.mubr.f32.mxu0 0.0
    %1232 = vmatmul.mubr.f32.gmra.mxu0 %v1109
    %v1233 = vpop.f32.mrf.mxu0
    %v1234 = vadd.f32 0.0, %v1233
    %v1235 = vpop.f32.mrf.mxu0
    %v1236 = vadd.f32 0.0, %v1235
    %1237 = vmatprep.mubr.f32.mxu0 0.0
    %1238 = vmatmul.mubr.f32.gmra.mxu0 %v1110
    %v1239 = vpop.f32.mrf.mxu0
    %v1240 = vadd.f32 0.0, %v1239
    %v1241 = vpop.f32.mrf.mxu0
    %v1242 = vadd.f32 0.0, %v1241
    %1243 = vmatprep.mubr.f32.mxu0 0.0
    %1244 = vmatmul.mubr.f32.gmra.mxu0 %v1111
    %v1245 = vpop.f32.mrf.mxu0
    %v1246 = vadd.f32 0.0, %v1245
    %v1247 = vpop.f32.mrf.mxu0
    %v1248 = vadd.f32 0.0, %v1247
    %1249 = vmatprep.mubr.f32.mxu0 0.0
    %1250 = vmatmul.mubr.f32.gmra.mxu0 %v1112
    %v1251 = vpop.f32.mrf.mxu0
    %v1252 = vadd.f32 0.0, %v1251
    %v1253 = vpop.f32.mrf.mxu0
    %v1254 = vadd.f32 0.0, %v1253
    %1255 = vmatprep.mubr.f32.mxu0 0.0
    %1256 = vmatmul.mubr.f32.gmra.mxu0 %v1113
    %v1257 = vpop.f32.mrf.mxu0
    %v1258 = vadd.f32 0.0, %v1257
    %v1259 = vpop.f32.mrf.mxu0
    %v1260 = vadd.f32 0.0, %v1259
    %1261 = vmatprep.mubr.f32.mxu0 0.0
    %1262 = vmatmul.mubr.f32.gmra.mxu0 %v1114
    %v1263 = vpop.f32.mrf.mxu0
    %v1264 = vadd.f32 0.0, %v1263
    %v1265 = vpop.f32.mrf.mxu0
    %v1266 = vadd.f32 0.0, %v1265
    %1267 = vmatprep.mubr.f32.mxu0 0.0
    %1268 = vmatmul.mubr.f32.gmra.mxu0 %v1115
    %v1269 = vpop.f32.mrf.mxu0
    %v1270 = vadd.f32 0.0, %v1269
    %v1271 = vpop.f32.mrf.mxu0
    %v1272 = vadd.f32 0.0, %v1271
    %1273 = vmatprep.mubr.f32.mxu0 0.0
    %1274 = vmatmul.mubr.f32.gmra.mxu0 %v1116
    %v1275 = vpop.f32.mrf.mxu0
    %v1276 = vadd.f32 0.0, %v1275
    %v1277 = vpop.f32.mrf.mxu0
    %v1278 = vadd.f32 0.0, %v1277
    %1279 = vmatprep.mubr.f32.mxu0 0.0
    %1280 = vmatmul.mubr.f32.gmra.mxu0 %v1117
    %v1281 = vpop.f32.mrf.mxu0
    %v1282 = vadd.f32 0.0, %v1281
    %v1283 = vpop.f32.mrf.mxu0
    %v1284 = vadd.f32 0.0, %v1283
    %1285 = vmatprep.mubr.f32.mxu0 0.0
    %1286 = vmatmul.mubr.f32.gmra.mxu0 %v1118
    %v1287 = vpop.f32.mrf.mxu0
    %v1288 = vadd.f32 0.0, %v1287
    %v1289 = vpop.f32.mrf.mxu0
    %v1290 = vadd.f32 0.0, %v1289
    %1291 = vmatprep.mubr.f32.mxu0 0.0
    %1292 = vmatmul.mubr.f32.gmra.mxu0 %v1119
    %v1293 = vpop.f32.mrf.mxu0
    %v1294 = vadd.f32 0.0, %v1293
    %v1295 = vpop.f32.mrf.mxu0
    %v1296 = vadd.f32 0.0, %v1295
    %1297 = vmatprep.mubr.f32.mxu0 0.0
    %1298 = vmatmul.mubr.f32.gmra.mxu0 %v1120
    %v1299 = vpop.f32.mrf.mxu0
    %v1300 = vadd.f32 0.0, %v1299
    %v1301 = vpop.f32.mrf.mxu0
    %v1302 = vadd.f32 0.0, %v1301
    %1303 = vmatprep.mubr.f32.mxu0 0.0
    %1304 = vmatmul.mubr.f32.gmra.mxu0 %v1121
    %v1305 = vpop.f32.mrf.mxu0
    %v1306 = vadd.f32 0.0, %v1305
    %v1307 = vpop.f32.mrf.mxu0
    %v1308 = vadd.f32 0.0, %v1307
    %1309 = vmatprep.mubr.f32.mxu0 0.0
    %1310 = vmatmul.mubr.f32.gmra.mxu0 %v1122
    %v1311 = vpop.f32.mrf.mxu0
    %v1312 = vadd.f32 0.0, %v1311
    %v1313 = vpop.f32.mrf.mxu0
    %v1314 = vadd.f32 0.0, %v1313
    %1315 = vdwg.mxu0
    %1316 = vmatprep.subr.mxu0 %v1314
    %1317 = vmatpush1.msra.mxu0 %v1312
    %1318 = vmatprep.subr.mxu0 %v1308
    %1319 = vmatpush1.msra.mxu0 %v1306
    %1320 = vmatprep.subr.mxu0 %v1302
    %1321 = vmatpush1.msra.mxu0 %v1300
    %1322 = vmatprep.subr.mxu0 %v1296
    %1323 = vmatpush1.msra.mxu0 %v1294
    %1324 = vmatprep.subr.mxu0 %v1290
    %1325 = vmatpush1.msra.mxu0 %v1288
    %1326 = vmatprep.subr.mxu0 %v1284
    %1327 = vmatpush1.msra.mxu0 %v1282
    %1328 = vmatprep.subr.mxu0 %v1278
    %1329 = vmatpush1.msra.mxu0 %v1276
    %1330 = vmatprep.subr.mxu0 %v1272
    %1331 = vmatpush1.msra.mxu0 %v1270
    %1332 = vmatprep.subr.mxu0 %v1266
    %1333 = vmatpush1.msra.mxu0 %v1264
    %1334 = vmatprep.subr.mxu0 %v1260
    %1335 = vmatpush1.msra.mxu0 %v1258
    %1336 = vmatprep.subr.mxu0 %v1254
    %1337 = vmatpush1.msra.mxu0 %v1252
    %1338 = vmatprep.subr.mxu0 %v1248
    %1339 = vmatpush1.msra.mxu0 %v1246
    %1340 = vmatprep.subr.mxu0 %v1242
    %1341 = vmatpush1.msra.mxu0 %v1240
    %1342 = vmatprep.subr.mxu0 %v1236
    %1343 = vmatpush1.msra.mxu0 %v1234
    %1344 = vmatprep.subr.mxu0 %v1230
    %1345 = vmatpush1.msra.mxu0 %v1228
    %1346 = vmatprep.subr.mxu0 %v1224
    %1347 = vmatpush1.msra.mxu0 %v1222
    %1348 = vmatprep.subr.mxu0 0.0
    %1349 = vmatpush2.msra.mxu0 0.0
    %1350 = vmatprep.subr.mxu0 0.0
    %1351 = vmatpush2.msra.mxu0 0.0
    %1352 = vmatprep.subr.mxu0 0.0
    %1353 = vmatpush2.msra.mxu0 0.0
    %1354 = vmatprep.subr.mxu0 0.0
    %1355 = vmatpush2.msra.mxu0 0.0
    %1356 = vmatprep.subr.mxu0 0.0
    %1357 = vmatpush2.msra.mxu0 0.0
    %1358 = vmatprep.subr.mxu0 0.0
    %1359 = vmatpush2.msra.mxu0 0.0
    %1360 = vmatprep.subr.mxu0 0.0
    %1361 = vmatpush2.msra.mxu0 0.0
    %1362 = vmatprep.subr.mxu0 0.0
    %1363 = vmatpush2.msra.mxu0 0.0
    %1364 = vmatprep.subr.mxu0 0.0
    %1365 = vmatpush2.msra.mxu0 0.0
    %1366 = vmatprep.subr.mxu0 0.0
    %1367 = vmatpush2.msra.mxu0 0.0
    %1368 = vmatprep.subr.mxu0 0.0
    %1369 = vmatpush2.msra.mxu0 0.0
    %1370 = vmatprep.subr.mxu0 0.0
    %1371 = vmatpush2.msra.mxu0 0.0
    %1372 = vmatprep.subr.mxu0 0.0
    %1373 = vmatpush2.msra.mxu0 0.0
    %1374 = vmatprep.subr.mxu0 0.0
    %1375 = vmatpush2.msra.mxu0 0.0
    %1376 = vmatprep.subr.mxu0 0.0
    %1377 = vmatpush2.msra.mxu0 0.0
    %1378 = vmatprep.subr.mxu0 0.0
    %1379 = vmatpush2.msra.mxu0 0.0
    %1380 = vmatprep.mubr.f32.mxu0 0.0
    %1381 = vmatmul.mubr.f32.gmra.mxu0 %v125
    %v1382 = vpop.f32.mrf.mxu0
    %v1383 = vadd.f32 0.0, %v1382
    %v1384 = vpop.f32.mrf.mxu0
    %v1385 = vadd.f32 0.0, %v1384
    %1386 = vmatprep.mubr.f32.mxu0 0.0
    %1387 = vmatmul.mubr.f32.gmra.mxu0 %v126
    %v1388 = vpop.f32.mrf.mxu0
    %v1389 = vadd.f32 0.0, %v1388
    %v1390 = vpop.f32.mrf.mxu0
    %v1391 = vadd.f32 0.0, %v1390
    %1392 = vmatprep.mubr.f32.mxu0 0.0
    %1393 = vmatmul.mubr.f32.gmra.mxu0 %v127
    %v1394 = vpop.f32.mrf.mxu0
    %v1395 = vadd.f32 0.0, %v1394
    %v1396 = vpop.f32.mrf.mxu0
    %v1397 = vadd.f32 0.0, %v1396
    %1398 = vmatprep.mubr.f32.mxu0 0.0
    %1399 = vmatmul.mubr.f32.gmra.mxu0 %v128
    %v1400 = vpop.f32.mrf.mxu0
    %v1401 = vadd.f32 0.0, %v1400
    %v1402 = vpop.f32.mrf.mxu0
    %v1403 = vadd.f32 0.0, %v1402
    %1404 = vmatprep.mubr.f32.mxu0 0.0
    %1405 = vmatmul.mubr.f32.gmra.mxu0 %v129
    %v1406 = vpop.f32.mrf.mxu0
    %v1407 = vadd.f32 0.0, %v1406
    %v1408 = vpop.f32.mrf.mxu0
    %v1409 = vadd.f32 0.0, %v1408
    %1410 = vmatprep.mubr.f32.mxu0 0.0
    %1411 = vmatmul.mubr.f32.gmra.mxu0 %v130
    %v1412 = vpop.f32.mrf.mxu0
    %v1413 = vadd.f32 0.0, %v1412
    %v1414 = vpop.f32.mrf.mxu0
    %v1415 = vadd.f32 0.0, %v1414
    %1416 = vmatprep.mubr.f32.mxu0 0.0
    %1417 = vmatmul.mubr.f32.gmra.mxu0 %v131
    %v1418 = vpop.f32.mrf.mxu0
    %v1419 = vadd.f32 0.0, %v1418
    %v1420 = vpop.f32.mrf.mxu0
    %v1421 = vadd.f32 0.0, %v1420
    %1422 = vmatprep.mubr.f32.mxu0 0.0
    %1423 = vmatmul.mubr.f32.gmra.mxu0 %v132
    %v1424 = vpop.f32.mrf.mxu0
    %v1425 = vadd.f32 0.0, %v1424
    %v1426 = vpop.f32.mrf.mxu0
    %v1427 = vadd.f32 0.0, %v1426
    %1428 = vmatprep.mubr.f32.mxu0 0.0
    %1429 = vmatmul.mubr.f32.gmra.mxu0 %v133
    %v1430 = vpop.f32.mrf.mxu0
    %v1431 = vadd.f32 0.0, %v1430
    %v1432 = vpop.f32.mrf.mxu0
    %v1433 = vadd.f32 0.0, %v1432
    %1434 = vmatprep.mubr.f32.mxu0 0.0
    %1435 = vmatmul.mubr.f32.gmra.mxu0 %v134
    %v1436 = vpop.f32.mrf.mxu0
    %v1437 = vadd.f32 0.0, %v1436
    %v1438 = vpop.f32.mrf.mxu0
    %v1439 = vadd.f32 0.0, %v1438
    %1440 = vmatprep.mubr.f32.mxu0 0.0
    %1441 = vmatmul.mubr.f32.gmra.mxu0 %v135
    %v1442 = vpop.f32.mrf.mxu0
    %v1443 = vadd.f32 0.0, %v1442
    %v1444 = vpop.f32.mrf.mxu0
    %v1445 = vadd.f32 0.0, %v1444
    %1446 = vmatprep.mubr.f32.mxu0 0.0
    %1447 = vmatmul.mubr.f32.gmra.mxu0 %v136
    %v1448 = vpop.f32.mrf.mxu0
    %v1449 = vadd.f32 0.0, %v1448
    %v1450 = vpop.f32.mrf.mxu0
    %v1451 = vadd.f32 0.0, %v1450
    %1452 = vmatprep.mubr.f32.mxu0 0.0
    %1453 = vmatmul.mubr.f32.gmra.mxu0 %v137
    %v1454 = vpop.f32.mrf.mxu0
    %v1455 = vadd.f32 0.0, %v1454
    %v1456 = vpop.f32.mrf.mxu0
    %v1457 = vadd.f32 0.0, %v1456
    %1458 = vmatprep.mubr.f32.mxu0 0.0
    %1459 = vmatmul.mubr.f32.gmra.mxu0 %v138
    %v1460 = vpop.f32.mrf.mxu0
    %v1461 = vadd.f32 0.0, %v1460
    %v1462 = vpop.f32.mrf.mxu0
    %v1463 = vadd.f32 0.0, %v1462
    %1464 = vmatprep.mubr.f32.mxu0 0.0
    %1465 = vmatmul.mubr.f32.gmra.mxu0 %v139
    %v1466 = vpop.f32.mrf.mxu0
    %v1467 = vadd.f32 0.0, %v1466
    %v1468 = vpop.f32.mrf.mxu0
    %v1469 = vadd.f32 0.0, %v1468
    %1470 = vmatprep.mubr.f32.mxu0 0.0
    %1471 = vmatmul.mubr.f32.gmra.mxu0 %v140
    %v1472 = vpop.f32.mrf.mxu0
    %v1473 = vadd.f32 0.0, %v1472
    %v1474 = vpop.f32.mrf.mxu0
    %v1475 = vadd.f32 0.0, %v1474
    %1476 = vdwg.mxu0
    %v1477 = vmax.f32 %v1383, 0.0
    %v1478 = vmax.f32 %v1389, 0.0
    %v1479 = vmax.f32 %v1395, 0.0
    %v1480 = vmax.f32 %v1401, 0.0
    %v1481 = vmax.f32 %v1407, 0.0
    %v1482 = vmax.f32 %v1413, 0.0
    %v1483 = vmax.f32 %v1419, 0.0
    %v1484 = vmax.f32 %v1425, 0.0
    %v1485 = vmax.f32 %v1431, 0.0
    %v1486 = vmax.f32 %v1437, 0.0
    %v1487 = vmax.f32 %v1443, 0.0
    %v1488 = vmax.f32 %v1449, 0.0
    %v1489 = vmax.f32 %v1455, 0.0
    %v1490 = vmax.f32 %v1461, 0.0
    %v1491 = vmax.f32 %v1467, 0.0
    %v1492 = vmax.f32 %v1473, 0.0
    %v1493 = vmul.f32 %v1385, 1.442695
    %v1494 = vpow.pop %v1493
    %v1495 = vmul.f32 %v1391, 1.442695
    %v1496 = vpow.pop %v1495
    %v1497 = vmul.f32 %v1397, 1.442695
    %v1498 = vpow.pop %v1497
    %v1499 = vmul.f32 %v1403, 1.442695
    %v1500 = vpow.pop %v1499
    %v1501 = vmul.f32 %v1409, 1.442695
    %v1502 = vpow.pop %v1501
    %v1503 = vmul.f32 %v1415, 1.442695
    %v1504 = vpow.pop %v1503
    %v1505 = vmul.f32 %v1421, 1.442695
    %v1506 = vpow.pop %v1505
    %v1507 = vmul.f32 %v1427, 1.442695
    %v1508 = vpow.pop %v1507
    %v1509 = vmul.f32 %v1433, 1.442695
    %v1510 = vpow.pop %v1509
    %v1511 = vmul.f32 %v1439, 1.442695
    %v1512 = vpow.pop %v1511
    %v1513 = vmul.f32 %v1445, 1.442695
    %v1514 = vpow.pop %v1513
    %v1515 = vmul.f32 %v1451, 1.442695
    %v1516 = vpow.pop %v1515
    %v1517 = vmul.f32 %v1457, 1.442695
    %v1518 = vpow.pop %v1517
    %v1519 = vmul.f32 %v1463, 1.442695
    %v1520 = vpow.pop %v1519
    %v1521 = vmul.f32 %v1469, 1.442695
    %v1522 = vpow.pop %v1521
    %v1523 = vmul.f32 %v1475, 1.442695
    %v1524 = vpow.pop %v1523
    %v1525 = vadd.f32 %v1494, 1.0
    %v1526 = vadd.f32 %v1496, 1.0
    %v1527 = vadd.f32 %v1498, 1.0
    %v1528 = vadd.f32 %v1500, 1.0
    %v1529 = vadd.f32 %v1502, 1.0
    %v1530 = vadd.f32 %v1504, 1.0
    %v1531 = vadd.f32 %v1506, 1.0
    %v1532 = vadd.f32 %v1508, 1.0
    %v1533 = vadd.f32 %v1510, 1.0
    %v1534 = vadd.f32 %v1512, 1.0
    %v1535 = vadd.f32 %v1514, 1.0
    %v1536 = vadd.f32 %v1516, 1.0
    %v1537 = vadd.f32 %v1518, 1.0
    %v1538 = vadd.f32 %v1520, 1.0
    %v1539 = vadd.f32 %v1522, 1.0
    %v1540 = vadd.f32 %v1524, 1.0
    %v1541 = vld [vmem:[#allocation7] sm:$0xff]
    %v1542 = vld [vmem:[#allocation7 + $0x8] sm:$0xff]
    %v1543 = vld [vmem:[#allocation7 + $0x10] sm:$0xff]
    %v1544 = vld [vmem:[#allocation7 + $0x18] sm:$0xff]
    %v1545 = vld [vmem:[#allocation7 + $0x20] sm:$0xff]
    %v1546 = vld [vmem:[#allocation7 + $0x28] sm:$0xff]
    %v1547 = vld [vmem:[#allocation7 + $0x30] sm:$0xff]
    %v1548 = vld [vmem:[#allocation7 + $0x38] sm:$0xff]
    %v1549 = vld [vmem:[#allocation7 + $0x40] sm:$0xff]
    %v1550 = vld [vmem:[#allocation7 + $0x48] sm:$0xff]
    %v1551 = vld [vmem:[#allocation7 + $0x50] sm:$0xff]
    %v1552 = vld [vmem:[#allocation7 + $0x58] sm:$0xff]
    %v1553 = vld [vmem:[#allocation7 + $0x60] sm:$0xff]
    %v1554 = vld [vmem:[#allocation7 + $0x68] sm:$0xff]
    %v1555 = vld [vmem:[#allocation7 + $0x70] sm:$0xff]
    %v1556 = vld [vmem:[#allocation7 + $0x78] sm:$0xff]
    %v1557 = vmul.f32 %v1541, %v1525
    %v1558 = vmul.f32 %v1542, %v1526
    %v1559 = vmul.f32 %v1543, %v1527
    %v1560 = vmul.f32 %v1544, %v1528
    %v1561 = vmul.f32 %v1545, %v1529
    %v1562 = vmul.f32 %v1546, %v1530
    %v1563 = vmul.f32 %v1547, %v1531
    %v1564 = vmul.f32 %v1548, %v1532
    %v1565 = vmul.f32 %v1549, %v1533
    %v1566 = vmul.f32 %v1550, %v1534
    %v1567 = vmul.f32 %v1551, %v1535
    %v1568 = vmul.f32 %v1552, %v1536
    %v1569 = vmul.f32 %v1553, %v1537
    %v1570 = vmul.f32 %v1554, %v1538
    %v1571 = vmul.f32 %v1555, %v1539
    %v1572 = vmul.f32 %v1556, %v1540
    %v1573 = vadd.f32 %v1557, %v1477
    %v1574 = vadd.f32 %v1558, %v1478
    %v1575 = vadd.f32 %v1559, %v1479
    %v1576 = vadd.f32 %v1560, %v1480
    %v1577 = vadd.f32 %v1561, %v1481
    %v1578 = vadd.f32 %v1562, %v1482
    %v1579 = vadd.f32 %v1563, %v1483
    %v1580 = vadd.f32 %v1564, %v1484
    %v1581 = vadd.f32 %v1565, %v1485
    %v1582 = vadd.f32 %v1566, %v1486
    %v1583 = vadd.f32 %v1567, %v1487
    %v1584 = vadd.f32 %v1568, %v1488
    %v1585 = vadd.f32 %v1569, %v1489
    %v1586 = vadd.f32 %v1570, %v1490
    %v1587 = vadd.f32 %v1571, %v1491
    %v1588 = vadd.f32 %v1572, %v1492
    %1589 = vst [vmem:[#allocation15] sm:$0xff] %v1573
    %1590 = vst [vmem:[#allocation15 + $0x8] sm:$0xff] %v1574
    %1591 = vst [vmem:[#allocation15 + $0x10] sm:$0xff] %v1575
    %1592 = vst [vmem:[#allocation15 + $0x18] sm:$0xff] %v1576
    %1593 = vst [vmem:[#allocation15 + $0x20] sm:$0xff] %v1577
    %1594 = vst [vmem:[#allocation15 + $0x28] sm:$0xff] %v1578
    %1595 = vst [vmem:[#allocation15 + $0x30] sm:$0xff] %v1579
    %1596 = vst [vmem:[#allocation15 + $0x38] sm:$0xff] %v1580
    %1597 = vst [vmem:[#allocation15 + $0x40] sm:$0xff] %v1581
    %1598 = vst [vmem:[#allocation15 + $0x48] sm:$0xff] %v1582
    %1599 = vst [vmem:[#allocation15 + $0x50] sm:$0xff] %v1583
    %1600 = vst [vmem:[#allocation15 + $0x58] sm:$0xff] %v1584
    %1601 = vst [vmem:[#allocation15 + $0x60] sm:$0xff] %v1585
    %1602 = vst [vmem:[#allocation15 + $0x68] sm:$0xff] %v1586
    %1603 = vst [vmem:[#allocation15 + $0x70] sm:$0xff] %v1587
    %1604 = vst [vmem:[#allocation15 + $0x78] sm:$0xff] %v1588
    %1605 = vmatprep.subr.mxu0 0.0
    %1606 = vmatpush1.xpose.msra.mxu0 %v1588
    %1607 = vmatprep.subr.mxu0 0.0
    %1608 = vmatpush1.xpose.msra.mxu0 %v1587
    %1609 = vmatprep.subr.mxu0 0.0
    %1610 = vmatpush1.xpose.msra.mxu0 %v1586
    %1611 = vmatprep.subr.mxu0 0.0
    %1612 = vmatpush1.xpose.msra.mxu0 %v1585
    %1613 = vmatprep.subr.mxu0 0.0
    %1614 = vmatpush1.xpose.msra.mxu0 %v1584
    %1615 = vmatprep.subr.mxu0 0.0
    %1616 = vmatpush1.xpose.msra.mxu0 %v1583
    %1617 = vmatprep.subr.mxu0 0.0
    %1618 = vmatpush1.xpose.msra.mxu0 %v1582
    %1619 = vmatprep.subr.mxu0 0.0
    %1620 = vmatpush1.xpose.msra.mxu0 %v1581
    %1621 = vmatprep.subr.mxu0 0.0
    %1622 = vmatpush1.xpose.msra.mxu0 %v1580
    %1623 = vmatprep.subr.mxu0 0.0
    %1624 = vmatpush1.xpose.msra.mxu0 %v1579
    %1625 = vmatprep.subr.mxu0 0.0
    %1626 = vmatpush1.xpose.msra.mxu0 %v1578
    %1627 = vmatprep.subr.mxu0 0.0
    %1628 = vmatpush1.xpose.msra.mxu0 %v1577
    %1629 = vmatprep.subr.mxu0 0.0
    %1630 = vmatpush1.xpose.msra.mxu0 %v1576
    %1631 = vmatprep.subr.mxu0 0.0
    %1632 = vmatpush1.xpose.msra.mxu0 %v1575
    %1633 = vmatprep.subr.mxu0 0.0
    %1634 = vmatpush1.xpose.msra.mxu0 %v1574
    %1635 = vmatprep.subr.mxu0 0.0
    %1636 = vmatpush1.xpose.msra.mxu0 %v1573
    %1637 = vmatprep.subr.mxu0 0.0
    %1638 = vmatpush2.xpose.msra.mxu0 0.0
    %1639 = vmatprep.subr.mxu0 0.0
    %1640 = vmatpush2.xpose.msra.mxu0 0.0
    %1641 = vmatprep.subr.mxu0 0.0
    %1642 = vmatpush2.xpose.msra.mxu0 0.0
    %1643 = vmatprep.subr.mxu0 0.0
    %1644 = vmatpush2.xpose.msra.mxu0 0.0
    %1645 = vmatprep.subr.mxu0 0.0
    %1646 = vmatpush2.xpose.msra.mxu0 0.0
    %1647 = vmatprep.subr.mxu0 0.0
    %1648 = vmatpush2.xpose.msra.mxu0 0.0
    %1649 = vmatprep.subr.mxu0 0.0
    %1650 = vmatpush2.xpose.msra.mxu0 0.0
    %1651 = vmatprep.subr.mxu0 0.0
    %1652 = vmatpush2.xpose.msra.mxu0 0.0
    %1653 = vmatprep.subr.mxu0 0.0
    %1654 = vmatpush2.xpose.msra.mxu0 0.0
    %1655 = vmatprep.subr.mxu0 0.0
    %1656 = vmatpush2.xpose.msra.mxu0 0.0
    %1657 = vmatprep.subr.mxu0 0.0
    %1658 = vmatpush2.xpose.msra.mxu0 0.0
    %1659 = vmatprep.subr.mxu0 0.0
    %1660 = vmatpush2.xpose.msra.mxu0 0.0
    %1661 = vmatprep.subr.mxu0 0.0
    %1662 = vmatpush2.xpose.msra.mxu0 0.0
    %1663 = vmatprep.subr.mxu0 0.0
    %1664 = vmatpush2.xpose.msra.mxu0 0.0
    %1665 = vmatprep.subr.mxu0 0.0
    %1666 = vmatpush2.xpose.msra.mxu0 0.0
    %1667 = vmatprep.subr.mxu0 0.0
    %1668 = vmatpush2.xpose.msra.mxu0 0.0
    %1669 = vmatprep.mubr.f32.mxu0 0.0
    %1670 = vmatmul.mubr.f32.gmra.mxu0 %v1573
    %v1671 = vpop.f32.mrf.mxu0
    %v1672 = vadd.f32 0.0, %v1671
    %v1673 = vpop.f32.mrf.mxu0
    %1674 = vmatprep.mubr.f32.mxu0 0.0
    %1675 = vmatmul.mubr.f32.gmra.mxu0 %v1574
    %v1676 = vpop.f32.mrf.mxu0
    %v1677 = vadd.f32 0.0, %v1676
    %v1678 = vpop.f32.mrf.mxu0
    %1679 = vmatprep.mubr.f32.mxu0 0.0
    %1680 = vmatmul.mubr.f32.gmra.mxu0 %v1575
    %v1681 = vpop.f32.mrf.mxu0
    %v1682 = vadd.f32 0.0, %v1681
    %v1683 = vpop.f32.mrf.mxu0
    %1684 = vmatprep.mubr.f32.mxu0 0.0
    %1685 = vmatmul.mubr.f32.gmra.mxu0 %v1576
    %v1686 = vpop.f32.mrf.mxu0
    %v1687 = vadd.f32 0.0, %v1686
    %v1688 = vpop.f32.mrf.mxu0
    %1689 = vmatprep.mubr.f32.mxu0 0.0
    %1690 = vmatmul.mubr.f32.gmra.mxu0 %v1577
    %v1691 = vpop.f32.mrf.mxu0
    %v1692 = vadd.f32 0.0, %v1691
    %v1693 = vpop.f32.mrf.mxu0
    %1694 = vmatprep.mubr.f32.mxu0 0.0
    %1695 = vmatmul.mubr.f32.gmra.mxu0 %v1578
    %v1696 = vpop.f32.mrf.mxu0
    %v1697 = vadd.f32 0.0, %v1696
    %v1698 = vpop.f32.mrf.mxu0
    %1699 = vmatprep.mubr.f32.mxu0 0.0
    %1700 = vmatmul.mubr.f32.gmra.mxu0 %v1579
    %v1701 = vpop.f32.mrf.mxu0
    %v1702 = vadd.f32 0.0, %v1701
    %v1703 = vpop.f32.mrf.mxu0
    %1704 = vmatprep.mubr.f32.mxu0 0.0
    %1705 = vmatmul.mubr.f32.gmra.mxu0 %v1580
    %v1706 = vpop.f32.mrf.mxu0
    %v1707 = vadd.f32 0.0, %v1706
    %v1708 = vpop.f32.mrf.mxu0
    %1709 = vmatprep.mubr.f32.mxu0 0.0
    %1710 = vmatmul.mubr.f32.gmra.mxu0 %v1581
    %v1711 = vpop.f32.mrf.mxu0
    %v1712 = vadd.f32 0.0, %v1711
    %v1713 = vpop.f32.mrf.mxu0
    %1714 = vmatprep.mubr.f32.mxu0 0.0
    %1715 = vmatmul.mubr.f32.gmra.mxu0 %v1582
    %v1716 = vpop.f32.mrf.mxu0
    %v1717 = vadd.f32 0.0, %v1716
    %v1718 = vpop.f32.mrf.mxu0
    %1719 = vmatprep.mubr.f32.mxu0 0.0
    %1720 = vmatmul.mubr.f32.gmra.mxu0 %v1583
    %v1721 = vpop.f32.mrf.mxu0
    %v1722 = vadd.f32 0.0, %v1721
    %v1723 = vpop.f32.mrf.mxu0
    %1724 = vmatprep.mubr.f32.mxu0 0.0
    %1725 = vmatmul.mubr.f32.gmra.mxu0 %v1584
    %v1726 = vpop.f32.mrf.mxu0
    %v1727 = vadd.f32 0.0, %v1726
    %v1728 = vpop.f32.mrf.mxu0
    %1729 = vmatprep.mubr.f32.mxu0 0.0
    %1730 = vmatmul.mubr.f32.gmra.mxu0 %v1585
    %v1731 = vpop.f32.mrf.mxu0
    %v1732 = vadd.f32 0.0, %v1731
    %v1733 = vpop.f32.mrf.mxu0
    %1734 = vmatprep.mubr.f32.mxu0 0.0
    %1735 = vmatmul.mubr.f32.gmra.mxu0 %v1586
    %v1736 = vpop.f32.mrf.mxu0
    %v1737 = vadd.f32 0.0, %v1736
    %v1738 = vpop.f32.mrf.mxu0
    %1739 = vmatprep.mubr.f32.mxu0 0.0
    %1740 = vmatmul.mubr.f32.gmra.mxu0 %v1587
    %v1741 = vpop.f32.mrf.mxu0
    %v1742 = vadd.f32 0.0, %v1741
    %v1743 = vpop.f32.mrf.mxu0
    %1744 = vmatprep.mubr.f32.mxu0 0.0
    %1745 = vmatmul.mubr.f32.gmra.mxu0 %v1588
    %v1746 = vpop.f32.mrf.mxu0
    %v1747 = vadd.f32 0.0, %v1746
    %v1748 = vpop.f32.mrf.mxu0
    %1749 = vdwg.mxu0
    %v1750 = vxor.u32 %v1672, 2147483648
    %v1751 = vxor.u32 %v1677, 2147483648
    %v1752 = vxor.u32 %v1682, 2147483648
    %v1753 = vxor.u32 %v1687, 2147483648
    %v1754 = vxor.u32 %v1692, 2147483648
    %v1755 = vxor.u32 %v1697, 2147483648
    %v1756 = vxor.u32 %v1702, 2147483648
    %v1757 = vxor.u32 %v1707, 2147483648
    %v1758 = vxor.u32 %v1712, 2147483648
    %v1759 = vxor.u32 %v1717, 2147483648
    %v1760 = vxor.u32 %v1722, 2147483648
    %v1761 = vxor.u32 %v1727, 2147483648
    %v1762 = vxor.u32 %v1732, 2147483648
    %v1763 = vxor.u32 %v1737, 2147483648
    %v1764 = vxor.u32 %v1742, 2147483648
    %v1765 = vxor.u32 %v1747, 2147483648
    %v1766 = vmul.f32 %v1750, 1.442695
    %v1767 = vpow.pop %v1766
    %v1768 = vmul.f32 %v1751, 1.442695
    %v1769 = vpow.pop %v1768
    %v1770 = vmul.f32 %v1752, 1.442695
    %v1771 = vpow.pop %v1770
    %v1772 = vmul.f32 %v1753, 1.442695
    %v1773 = vpow.pop %v1772
    %v1774 = vmul.f32 %v1754, 1.442695
    %v1775 = vpow.pop %v1774
    %v1776 = vmul.f32 %v1755, 1.442695
    %v1777 = vpow.pop %v1776
    %v1778 = vmul.f32 %v1756, 1.442695
    %v1779 = vpow.pop %v1778
    %v1780 = vmul.f32 %v1757, 1.442695
    %v1781 = vpow.pop %v1780
    %v1782 = vmul.f32 %v1758, 1.442695
    %v1783 = vpow.pop %v1782
    %v1784 = vmul.f32 %v1759, 1.442695
    %v1785 = vpow.pop %v1784
    %v1786 = vmul.f32 %v1760, 1.442695
    %v1787 = vpow.pop %v1786
    %v1788 = vmul.f32 %v1761, 1.442695
    %v1789 = vpow.pop %v1788
    %v1790 = vmul.f32 %v1762, 1.442695
    %v1791 = vpow.pop %v1790
    %v1792 = vmul.f32 %v1763, 1.442695
    %v1793 = vpow.pop %v1792
    %v1794 = vmul.f32 %v1764, 1.442695
    %v1795 = vpow.pop %v1794
    %v1796 = vmul.f32 %v1765, 1.442695
    %v1797 = vpow.pop %v1796
    %v1798 = vadd.f32 %v1767, 1.0
    %v1799 = vadd.f32 %v1769, 1.0
    %v1800 = vadd.f32 %v1771, 1.0
    %v1801 = vadd.f32 %v1773, 1.0
    %v1802 = vadd.f32 %v1775, 1.0
    %v1803 = vadd.f32 %v1777, 1.0
    %v1804 = vadd.f32 %v1779, 1.0
    %v1805 = vadd.f32 %v1781, 1.0
    %v1806 = vadd.f32 %v1783, 1.0
    %v1807 = vadd.f32 %v1785, 1.0
    %v1808 = vadd.f32 %v1787, 1.0
    %v1809 = vadd.f32 %v1789, 1.0
    %v1810 = vadd.f32 %v1791, 1.0
    %v1811 = vadd.f32 %v1793, 1.0
    %v1812 = vadd.f32 %v1795, 1.0
    %v1813 = vadd.f32 %v1797, 1.0
    %v1814 = vrcp.pop %v1798
    %v1815 = vmul.f32 1.0, %v1814
    %v1816 = vrcp.pop %v1799
    %v1817 = vmul.f32 1.0, %v1816
    %v1818 = vrcp.pop %v1800
    %v1819 = vmul.f32 1.0, %v1818
    %v1820 = vrcp.pop %v1801
    %v1821 = vmul.f32 1.0, %v1820
    %v1822 = vrcp.pop %v1802
    %v1823 = vmul.f32 1.0, %v1822
    %v1824 = vrcp.pop %v1803
    %v1825 = vmul.f32 1.0, %v1824
    %v1826 = vrcp.pop %v1804
    %v1827 = vmul.f32 1.0, %v1826
    %v1828 = vrcp.pop %v1805
    %v1829 = vmul.f32 1.0, %v1828
    %v1830 = vrcp.pop %v1806
    %v1831 = vmul.f32 1.0, %v1830
    %v1832 = vrcp.pop %v1807
    %v1833 = vmul.f32 1.0, %v1832
    %v1834 = vrcp.pop %v1808
    %v1835 = vmul.f32 1.0, %v1834
    %v1836 = vrcp.pop %v1809
    %v1837 = vmul.f32 1.0, %v1836
    %v1838 = vrcp.pop %v1810
    %v1839 = vmul.f32 1.0, %v1838
    %v1840 = vrcp.pop %v1811
    %v1841 = vmul.f32 1.0, %v1840
    %v1842 = vrcp.pop %v1812
    %v1843 = vmul.f32 1.0, %v1842
    %v1844 = vrcp.pop %v1813
    %v1845 = vmul.f32 1.0, %v1844
    %1846 = vst [vmem:[#allocation14] sm:$0xff] %v1815
    %1847 = vst [vmem:[#allocation14 + $0x8] sm:$0xff] %v1817
    %1848 = vst [vmem:[#allocation14 + $0x10] sm:$0xff] %v1819
    %1849 = vst [vmem:[#allocation14 + $0x18] sm:$0xff] %v1821
    %1850 = vst [vmem:[#allocation14 + $0x20] sm:$0xff] %v1823
    %1851 = vst [vmem:[#allocation14 + $0x28] sm:$0xff] %v1825
    %1852 = vst [vmem:[#allocation14 + $0x30] sm:$0xff] %v1827
    %1853 = vst [vmem:[#allocation14 + $0x38] sm:$0xff] %v1829
    %1854 = vst [vmem:[#allocation14 + $0x40] sm:$0xff] %v1831
    %1855 = vst [vmem:[#allocation14 + $0x48] sm:$0xff] %v1833
    %1856 = vst [vmem:[#allocation14 + $0x50] sm:$0xff] %v1835
    %1857 = vst [vmem:[#allocation14 + $0x58] sm:$0xff] %v1837
    %1858 = vst [vmem:[#allocation14 + $0x60] sm:$0xff] %v1839
    %1859 = vst [vmem:[#allocation14 + $0x68] sm:$0xff] %v1841
    %1860 = vst [vmem:[#allocation14 + $0x70] sm:$0xff] %v1843
    %1861 = vst [vmem:[#allocation14 + $0x78] sm:$0xff] %v1845
    // Predicated region
    $region58: #{tpu_custom_call.1} parent=1 // pred_check
      _
    $region59: #{tpu_custom_call.1} parent=1 // pred_check_branch
      %1863 = sbr.rel (0) target = $region61
    $region60: #{tpu_custom_call.1} parent=1 // pred_region
      %s1865 = ssub.s32 2048, 2048
      %1866 = vsyncadd [#allocation4], %s1865
      %s1867 = sshll.u32 [#allocation14], 4
      %s1868 = int_to_ptr.vmem [resolvable:$true] %s1867
      %1873 = dma.vmem_to_hbm [thread:$0]  %s1868, 2048, %s7, [#allocation4], 128, 128, 8
    $region61: #{tpu_custom_call.1} parent=1 // pred_fallthru
      _
    // Predicated region
    $region62: #{tpu_custom_call.1} parent=1 // pred_check
      _
    $region63: #{tpu_custom_call.1} parent=1 // pred_check_branch
      %1875 = sbr.rel (0) target = $region65
    $region64: #{tpu_custom_call.1} parent=1 // pred_region
      %s1877 = ssub.s32 2048, 2048
      %1878 = vsyncadd [#allocation16], %s1877
      %s1879 = sshll.u32 [#allocation15], 4
      %s1880 = int_to_ptr.vmem [resolvable:$true] %s1879
      %1885 = dma.vmem_to_hbm [thread:$0]  %s1880, 2048, %s8, [#allocation16], 128, 128, 8
    $region65: #{tpu_custom_call.1} parent=1 // pred_fallthru
      _
    // Predicated region
    $region66: #{tpu_custom_call.1} parent=1 // pred_check
      _
    $region67: #{tpu_custom_call.1} parent=1 // pred_check_branch
      %1887 = sbr.rel (0) target = $region69
    $region68: #{tpu_custom_call.1} parent=1 // pred_region
      %1888 = dma.done [#allocation4], 2048
    $region69: #{tpu_custom_call.1} parent=1 // pred_fallthru
      _
    // Predicated region
    $region70: #{tpu_custom_call.1} parent=1 // pred_check
      _
    $region71: #{tpu_custom_call.1} parent=1 // pred_check_branch
      %1890 = sbr.rel (0) target = $region73
    $region72: #{tpu_custom_call.1} parent=1 // pred_region
      %1891 = dma.done [#allocation16], 2048
    $region73: #{tpu_custom_call.1} parent=1 // pred_fallthru
      _
    %1892 = vsyncpa [#allocation3], 1
    %1893 = vsyncpa [#allocation6], 1
    %1894 = vsyncpa [#allocation9], 1
    %1895 = vsyncpa [#allocation12], 1
    %1896 = vsyncpa [#allocation4], 1
    %1897 = vsyncpa [#allocation16], 1

</llo_original>
